<compile_context>
chip_gen: v6e
topology: v6e:2x2x1
jax: 0.10.0
libtpu: 0.0.40
codegen_flags: <defaults>
</compile_context>

<pallas_src>
import functools

import jax
import jax.numpy as jnp
from jax.experimental import pallas as pl
from jax.experimental.pallas import tpu as pltpu


def _round_up(n, m):
    return ((n + m - 1) // m) * m


# ----------------------------------------------------------------------------
# Fused Pallas kernel: all GCL blocks, activation resident in VMEM.
# ----------------------------------------------------------------------------
def gclnet_kernel(mask_ref, x_ref, wconv_ref, bconv_ref, wproj_ref, pvec_ref,
                  out_ref, xbuf_ref, *, B, T, K, Cin, Cp, Hp, eps):
    layer = pl.program_id(0)
    pad = (K - 1) // 2
    BT = B * T

    # ---- layer 0: initialize the resident, time-padded activation buffer ----
    @pl.when(layer == 0)
    def _():
        xbuf_ref[...] = jnp.zeros_like(xbuf_ref)   # zeros double as the conv halo
        xin = x_ref[...].astype(jnp.float32) * mask_ref[...].astype(jnp.float32)
        xbuf_ref[:, pl.ds(pad, T), :] = xin.astype(xbuf_ref.dtype)

    # ---- grouped conv: K accumulated MXU matmuls over shifted windows --------
    # Each tap reads a static (B, T, Cp) slice of the resident buffer; same MXU
    # pass count as one (BT, K*Cp) contraction, without the im2col concat copy.
    x_center = None
    acc = None
    for k in range(K):
        xk = xbuf_ref[:, pl.ds(k, T), :].reshape(BT, Cp).astype(jnp.float32)
        if k == pad:
            x_center = xk                                      # residual tap
        d = jnp.dot(xk, wconv_ref[0, k].astype(jnp.float32),
                    preferred_element_type=jnp.float32)        # (BT, 2*Hp)
        acc = d if acc is None else acc + d
    y = acc + bconv_ref[0].astype(jnp.float32)                 # (1, 2*Hp) bcast

    # ---- GLU gate (split at a 128-lane boundary) -----------------------------
    a = y[:, :Hp]
    b = y[:, Hp:]
    g = a * jax.nn.sigmoid(b)                                  # (BT, Hp)

    # ---- pointwise projection back to (padded) input channels ----------------
    pv = pvec_ref[0].astype(jnp.float32)                       # (3, Cp): bproj/gamma/beta
    z = jnp.dot(g, wproj_ref[0].astype(jnp.float32),
                preferred_element_type=jnp.float32)            # (BT, Cp)
    z = z + pv[0:1, :]

    # Dropout is identity at inference; residual = pre-layer center tap.
    r = x_center + z                                           # (BT, Cp)

    # ---- LayerNorm over the REAL Cin channels only ----------------------------
    # Padded channel lanes of r are exactly zero, so sum(r) == sum over Cin.
    inv_cin = 1.0 / Cin
    mu = jnp.sum(r, axis=-1, keepdims=True) * inv_cin
    ch_mask = (jax.lax.broadcasted_iota(jnp.int32, (1, Cp), 1) < Cin
               ).astype(jnp.float32)
    rc = (r - mu) * ch_mask                                    # zero on padded lanes
    var = jnp.sum(rc * rc, axis=-1, keepdims=True) * inv_cin
    rn = rc * jax.lax.rsqrt(var + eps)
    rn = rn * pv[1:2, :] + pv[2:3, :]                          # gamma/beta (0 on pad lanes)

    # ---- re-apply the sequence mask -------------------------------------------
    mk = mask_ref[...].reshape(BT, 1).astype(jnp.float32)
    rn = (rn * mk).reshape(B, T, Cp)

    # Next layer reads this; zero halo / zero padded lanes are preserved.
    xbuf_ref[:, pl.ds(pad, T), :] = rn.astype(xbuf_ref.dtype)

    @pl.when(layer == pl.num_programs(0) - 1)
    def _():
        out_ref[...] = rn.astype(out_ref.dtype)


# ----------------------------------------------------------------------------
# Wrapper: one pallas_call for the whole GCLNet, grid over layers.
# ----------------------------------------------------------------------------
def gclnet_forward(x_btc, mask_keep, stacked, *, kernel_size, num_input, eps=1e-5):
    """x_btc: (B, T, Cin) float32; mask_keep: (B, T, 1) float32 of {1., 0.}."""
    B, T, Cin = x_btc.shape
    assert Cin == num_input
    L, Kw, Cp_w, H2p = stacked["wconv"].shape
    Hp, Cp = stacked["wproj"].shape[1], stacked["wproj"].shape[2]
    K = kernel_size
    pad = (K - 1) // 2
    Tp = T + 2 * pad
    assert Kw == K and Cp_w == Cp and H2p == 2 * Hp

    # Lane-pad the channel axis once (weights are padded in pack_params).
    xp = jnp.pad(x_btc, ((0, 0), (0, 0), (0, Cp - Cin)))

    kern = functools.partial(gclnet_kernel, B=B, T=T, K=K, Cin=Cin, Cp=Cp,
                             Hp=Hp, eps=eps)

    out = pl.pallas_call(
        kern,
        out_shape=jax.ShapeDtypeStruct((B, T, Cp), x_btc.dtype),
        grid=(L,),
        in_specs=[
            pl.BlockSpec((B, T, 1), lambda l: (0, 0, 0)),              # keep-mask (resident)
            pl.BlockSpec((B, T, Cp), lambda l: (0, 0, 0)),             # input (resident)
            pl.BlockSpec((1, K, Cp, 2 * Hp), lambda l: (l, 0, 0, 0)),  # conv W, per layer
            pl.BlockSpec((1, 1, 2 * Hp), lambda l: (l, 0, 0)),         # conv bias, per layer
            pl.BlockSpec((1, Hp, Cp), lambda l: (l, 0, 0)),            # proj W, per layer
            pl.BlockSpec((1, 3, Cp), lambda l: (l, 0, 0)),             # [bproj; gamma; beta]
        ],
        out_specs=pl.BlockSpec((B, T, Cp), lambda l: (0, 0, 0)),
        scratch_shapes=[pltpu.VMEM((B, Tp, Cp), jnp.float32)],         # resident activation
        compiler_params=pltpu.CompilerParams(
            dimension_semantics=("arbitrary",),    # layers are strictly sequential
            vmem_limit_bytes=32 * 1024 * 1024,
        ),
    )(mask_keep, xp, stacked["wconv"], stacked["bconv"],
      stacked["wproj"], stacked["pvec"])

    return out[:, :, :Cin]


# ----------------------------------------------------------------------------
# Parameter construction (deterministic, synthetic) + packing for the kernel.
# ----------------------------------------------------------------------------
def make_block_params(key, num_input, num_hidden, kernel_size, groups):
    """PyTorch-convention parameters for one GCLBlock."""
    k1, k2, k3, k4 = jax.random.split(key, 4)
    Cin, H, K, G = num_input, num_hidden, kernel_size, groups
    cin_g, cout_g = Cin // G, (2 * H) // G

    # PyTorch grouped Conv1d weight: (2H, Cin//G, K)
    w_grouped = 0.1 * jax.random.normal(k1, (2 * H, cin_g, K), jnp.float32)
    b_conv = 0.1 * jax.random.normal(k2, (2 * H,), jnp.float32)
    # Pointwise Conv1d(H -> Cin) weight: (Cin, H, 1) -> stored as (H, Cin)
    w_proj = 0.1 * jax.random.normal(k3, (Cin, H, 1), jnp.float32)
    b_proj = 0.1 * jax.random.normal(k4, (Cin,), jnp.float32)
    gamma = jnp.ones((Cin,), jnp.float32)
    beta = jnp.zeros((Cin,), jnp.float32)

    # Expand grouped conv weight to dense block-diagonal per-tap: (K, Cin, 2H)
    wconv_dense = jnp.zeros((K, Cin, 2 * H), jnp.float32)
    for g in range(G):
        blk = w_grouped[g * cout_g:(g + 1) * cout_g]        # (cout_g, cin_g, K)
        wconv_dense = wconv_dense.at[
            :, g * cin_g:(g + 1) * cin_g, g * cout_g:(g + 1) * cout_g
        ].set(jnp.transpose(blk, (2, 1, 0)))

    return {
        "wconv_dense": wconv_dense,                          # (K, Cin, 2H)
        "bconv": b_conv,                                     # (2H,)
        "wproj": jnp.transpose(w_proj[:, :, 0], (1, 0)),     # (H, Cin)
        "bproj": b_proj,                                     # (Cin,)
        "gamma": gamma,
        "beta": beta,
    }


def pack_params(block_params, num_input, num_hidden, kernel_size):
    """Stack per-layer params with a leading layer axis and lane-pad channels."""
    Cin, H, K = num_input, num_hidden, kernel_size
    Cp = _round_up(Cin, 128)
    Hp = _round_up(H, 128)

    wconv_l, bconv_l, wproj_l, pvec_l = [], [], [], []
    for p in block_params:
        # Conv weights, per tap: a-half in lanes [0, H), b-half in lanes
        # [Hp, Hp+H) so the GLU split sits on a 128-lane boundary: (K, Cp, 2*Hp).
        w = jnp.zeros((K, Cp, 2 * Hp), jnp.float32)
        w = w.at[:, :Cin, :H].set(p["wconv_dense"][:, :, :H])
        w = w.at[:, :Cin, Hp:Hp + H].set(p["wconv_dense"][:, :, H:])
        wconv_l.append(w)

        b = jnp.zeros((1, 2 * Hp), jnp.float32)
        b = b.at[0, :H].set(p["bconv"][:H])
        b = b.at[0, Hp:Hp + H].set(p["bconv"][H:])
        bconv_l.append(b)

        wp = jnp.zeros((Hp, Cp), jnp.float32)
        wp = wp.at[:H, :Cin].set(p["wproj"])
        wproj_l.append(wp)

        pv = jnp.zeros((3, Cp), jnp.float32)
        pv = pv.at[0, :Cin].set(p["bproj"])
        pv = pv.at[1, :Cin].set(p["gamma"])
        pv = pv.at[2, :Cin].set(p["beta"])
        pvec_l.append(pv)

    return {
        "wconv": jnp.stack(wconv_l),   # (L, K, Cp, 2*Hp)
        "bconv": jnp.stack(bconv_l),   # (L, 1, 2*Hp)
        "wproj": jnp.stack(wproj_l),   # (L, Hp, Cp)
        "pvec": jnp.stack(pvec_l),     # (L, 3, Cp)
    }


# ----------------------------------------------------------------------------
# Pure-JAX reference (same math, no Pallas) for the correctness check.
# ----------------------------------------------------------------------------
def ref_block(x, mk, p, K):
    pad = (K - 1) // 2
    T = x.shape[1]
    H = p["wproj"].shape[0]
    xpad = jnp.pad(x, ((0, 0), (pad, pad), (0, 0)))
    y = sum(jnp.einsum("btc,cd->btd", xpad[:, k:k + T], p["wconv_dense"][k])
            for k in range(K)) + p["bconv"]
    a, b = y[..., :H], y[..., H:]
    g = a * jax.nn.sigmoid(b)
    z = jnp.einsum("bth,hc->btc", g, p["wproj"]) + p["bproj"]
    r = x + z
    mu = r.mean(-1, keepdims=True)
    var = ((r - mu) ** 2).mean(-1, keepdims=True)
    rn = (r - mu) / jnp.sqrt(var + 1e-5) * p["gamma"] + p["beta"]
    return rn * mk


def ref_forward(x, mk, block_params, K):
    x = x * mk
    for p in block_params:
        x = ref_block(x, mk, p, K)
    return x


# ----------------------------------------------------------------------------
if __name__ == "__main__":
    B, T, Cin = 2, 16, 8            # num_input = 8
    num_hidden = 16
    kernel_size = 5
    num_layer = 3
    group_size = 4

    root = jax.random.PRNGKey(0)
    kx, *kb = jax.random.split(root, 1 + num_layer)

    # Input in the PyTorch convention (B, C, T), moved to kernel layout (B, T, C).
    x_ncl = jax.random.normal(kx, (B, Cin, T), jnp.float32)
    x_btc = jnp.transpose(x_ncl, (0, 2, 1))

    # Sequence keep-mask (B, T, 1): batch 0 full length, batch 1 length 12.
    lengths = jnp.array([T, 12])
    mask_keep = (jnp.arange(T)[None, :] < lengths[:, None]).astype(jnp.float32)[..., None]

    block_params = [make_block_params(kb[i], Cin, num_hidden, kernel_size, group_size)
                    for i in range(num_layer)]
    stacked = pack_params(block_params, Cin, num_hidden, kernel_size)

    out = gclnet_forward(x_btc, mask_keep, stacked,
                         kernel_size=kernel_size, num_input=Cin)
    out = jax.block_until_ready(out)

    ref = ref_forward(x_btc, mask_keep, block_params, kernel_size)
    assert out.shape == (B, T, Cin)
    assert jnp.allclose(out, ref, atol=1e-4, rtol=1e-4), "Pallas output mismatch vs reference"

    print("KERNEL_OK")
</pallas_src>

<mosaic_0001>
module attributes {stable_mosaic.version = 11 : i64} {
  func.func @gclnet_kernel(%arg0: i32, %arg1: memref<2x16x1xf32, #tpu.memory_space<vmem>>, %arg2: memref<2x16x128xf32, #tpu.memory_space<vmem>>, %arg3: memref<1x5x128x256xf32, #tpu.memory_space<vmem>>, %arg4: memref<1x1x256xf32, #tpu.memory_space<vmem>>, %arg5: memref<1x128x128xf32, #tpu.memory_space<vmem>>, %arg6: memref<1x3x128xf32, #tpu.memory_space<vmem>>, %arg7: memref<2x16x128xf32, #tpu.memory_space<vmem>>, %arg8: memref<2x20x128xf32, #tpu.memory_space<vmem>>) attributes {dimension_semantics = [#tpu.dimension_semantics<arbitrary>], iteration_bounds = array<i64: 3>, scalar_prefetch = 0 : i64, scratch_operands = 1 : i64, tpu.core_type = #tpu.core_type<tc>, window_params = [{pipeline_mode = #tpu.pipeline_mode<synchronous>, transform_indices = @transform_0, window_bounds = array<i64: 2, 16, 1>}, {pipeline_mode = #tpu.pipeline_mode<synchronous>, transform_indices = @transform_1, window_bounds = array<i64: 2, 16, 128>}, {transform_indices = @transform_2, window_bounds = array<i64: 1, 5, 128, 256>}, {transform_indices = @transform_3, window_bounds = array<i64: 1, 1, 256>}, {transform_indices = @transform_4, window_bounds = array<i64: 1, 128, 128>}, {transform_indices = @transform_5, window_bounds = array<i64: 1, 3, 128>}, {pipeline_mode = #tpu.pipeline_mode<synchronous>, transform_indices = @transform_6, window_bounds = array<i64: 2, 16, 128>}]} {
    %c0_i32 = arith.constant 0 : i32
    %0 = arith.cmpi eq, %arg0, %c0_i32 : i32
    %1 = arith.extui %0 : i1 to i32
    %c0_i32_0 = arith.constant 0 : i32
    %2 = arith.cmpi ne, %1, %c0_i32_0 : i32
    scf.if %2 {
      %cst_58 = arith.constant 0.000000e+00 : f32
      %91 = vector.broadcast %cst_58 : f32 to vector<2x20x128xf32>
      %c0_59 = arith.constant 0 : index
      %c0_60 = arith.constant 0 : index
      %c0_61 = arith.constant 0 : index
      %92 = vector.load %arg8[%c0_59, %c0_60, %c0_61] : memref<2x20x128xf32, #tpu.memory_space<vmem>>, vector<2x20x128xf32>
      tpu.vector_store %arg8[%c0_59, %c0_60, %c0_61], %91 {strides = array<i32>} : memref<2x20x128xf32, #tpu.memory_space<vmem>>, vector<2x20x128xf32>,
      %c0_62 = arith.constant 0 : index
      %c0_63 = arith.constant 0 : index
      %c0_64 = arith.constant 0 : index
      %93 = vector.load %arg2[%c0_62, %c0_63, %c0_64] : memref<2x16x128xf32, #tpu.memory_space<vmem>>, vector<2x16x128xf32>
      %c0_65 = arith.constant 0 : index
      %c0_66 = arith.constant 0 : index
      %c0_67 = arith.constant 0 : index
      %94 = vector.load %arg1[%c0_65, %c0_66, %c0_67] : memref<2x16x1xf32, #tpu.memory_space<vmem>>, vector<2x16x1xf32>
      %95 = vector.broadcast %94 : vector<2x16x1xf32> to vector<2x16x128xf32>
      %96 = arith.mulf %93, %95 : vector<2x16x128xf32>
      %c0_68 = arith.constant 0 : index
      %c2_69 = arith.constant 2 : index
      %c0_70 = arith.constant 0 : index
      %97 = vector.load %arg8[%c0_68, %c2_69, %c0_70] : memref<2x20x128xf32, #tpu.memory_space<vmem>>, vector<2x16x128xf32>
      tpu.vector_store %arg8[%c0_68, %c2_69, %c0_70], %96 {strides = array<i32>} : memref<2x20x128xf32, #tpu.memory_space<vmem>>, vector<2x16x128xf32>,
    } else {
    }
    %c0 = arith.constant 0 : index
    %c0_1 = arith.constant 0 : index
    %c0_2 = arith.constant 0 : index
    %3 = vector.load %arg8[%c0, %c0_1, %c0_2] : memref<2x20x128xf32, #tpu.memory_space<vmem>>, vector<2x16x128xf32>
    %4 = vector.shape_cast %3 : vector<2x16x128xf32> to vector<32x128xf32>
    %c0_3 = arith.constant 0 : index
    %c0_4 = arith.constant 0 : index
    %c0_5 = arith.constant 0 : index
    %c0_6 = arith.constant 0 : index
    %5 = vector.load %arg3[%c0_3, %c0_4, %c0_5, %c0_6] : memref<1x5x128x256xf32, #tpu.memory_space<vmem>>, vector<1x1x128x256xf32>
    %6 = vector.shape_cast %5 : vector<1x1x128x256xf32> to vector<128x256xf32>
    %cst = arith.constant dense<0.000000e+00> : vector<32x256xf32>
    %7 = tpu.matmul %4, %6, %cst {dimension_numbers = #tpu.dot_dimension_numbers<[1], [0], [0], [1], [0, 0, 1, 1], [], []>} : vector<32x128xf32>, vector<128x256xf32>, vector<32x256xf32> -> vector<32x256xf32>
    %c0_7 = arith.constant 0 : index
    %c1 = arith.constant 1 : index
    %c0_8 = arith.constant 0 : index
    %8 = vector.load %arg8[%c0_7, %c1, %c0_8] : memref<2x20x128xf32, #tpu.memory_space<vmem>>, vector<2x16x128xf32>
    %9 = vector.shape_cast %8 : vector<2x16x128xf32> to vector<32x128xf32>
    %c0_9 = arith.constant 0 : index
    %c1_10 = arith.constant 1 : index
    %c0_11 = arith.constant 0 : index
    %c0_12 = arith.constant 0 : index
    %10 = vector.load %arg3[%c0_9, %c1_10, %c0_11, %c0_12] : memref<1x5x128x256xf32, #tpu.memory_space<vmem>>, vector<1x1x128x256xf32>
    %11 = vector.shape_cast %10 : vector<1x1x128x256xf32> to vector<128x256xf32>
    %cst_13 = arith.constant dense<0.000000e+00> : vector<32x256xf32>
    %12 = tpu.matmul %9, %11, %cst_13 {dimension_numbers = #tpu.dot_dimension_numbers<[1], [0], [0], [1], [0, 0, 1, 1], [], []>} : vector<32x128xf32>, vector<128x256xf32>, vector<32x256xf32> -> vector<32x256xf32>
    %13 = arith.addf %7, %12 : vector<32x256xf32>
    %c0_14 = arith.constant 0 : index
    %c2 = arith.constant 2 : index
    %c0_15 = arith.constant 0 : index
    %14 = vector.load %arg8[%c0_14, %c2, %c0_15] : memref<2x20x128xf32, #tpu.memory_space<vmem>>, vector<2x16x128xf32>
    %15 = vector.shape_cast %14 : vector<2x16x128xf32> to vector<32x128xf32>
    %c0_16 = arith.constant 0 : index
    %c2_17 = arith.constant 2 : index
    %c0_18 = arith.constant 0 : index
    %c0_19 = arith.constant 0 : index
    %16 = vector.load %arg3[%c0_16, %c2_17, %c0_18, %c0_19] : memref<1x5x128x256xf32, #tpu.memory_space<vmem>>, vector<1x1x128x256xf32>
    %17 = vector.shape_cast %16 : vector<1x1x128x256xf32> to vector<128x256xf32>
    %cst_20 = arith.constant dense<0.000000e+00> : vector<32x256xf32>
    %18 = tpu.matmul %15, %17, %cst_20 {dimension_numbers = #tpu.dot_dimension_numbers<[1], [0], [0], [1], [0, 0, 1, 1], [], []>} : vector<32x128xf32>, vector<128x256xf32>, vector<32x256xf32> -> vector<32x256xf32>
    %19 = arith.addf %13, %18 : vector<32x256xf32>
    %c0_21 = arith.constant 0 : index
    %c3 = arith.constant 3 : index
    %c0_22 = arith.constant 0 : index
    %20 = vector.load %arg8[%c0_21, %c3, %c0_22] : memref<2x20x128xf32, #tpu.memory_space<vmem>>, vector<2x16x128xf32>
    %21 = vector.shape_cast %20 : vector<2x16x128xf32> to vector<32x128xf32>
    %c0_23 = arith.constant 0 : index
    %c3_24 = arith.constant 3 : index
    %c0_25 = arith.constant 0 : index
    %c0_26 = arith.constant 0 : index
    %22 = vector.load %arg3[%c0_23, %c3_24, %c0_25, %c0_26] : memref<1x5x128x256xf32, #tpu.memory_space<vmem>>, vector<1x1x128x256xf32>
    %23 = vector.shape_cast %22 : vector<1x1x128x256xf32> to vector<128x256xf32>
    %cst_27 = arith.constant dense<0.000000e+00> : vector<32x256xf32>
    %24 = tpu.matmul %21, %23, %cst_27 {dimension_numbers = #tpu.dot_dimension_numbers<[1], [0], [0], [1], [0, 0, 1, 1], [], []>} : vector<32x128xf32>, vector<128x256xf32>, vector<32x256xf32> -> vector<32x256xf32>
    %25 = arith.addf %19, %24 : vector<32x256xf32>
    %c0_28 = arith.constant 0 : index
    %c4 = arith.constant 4 : index
    %c0_29 = arith.constant 0 : index
    %26 = vector.load %arg8[%c0_28, %c4, %c0_29] : memref<2x20x128xf32, #tpu.memory_space<vmem>>, vector<2x16x128xf32>
    %27 = vector.shape_cast %26 : vector<2x16x128xf32> to vector<32x128xf32>
    %c0_30 = arith.constant 0 : index
    %c4_31 = arith.constant 4 : index
    %c0_32 = arith.constant 0 : index
    %c0_33 = arith.constant 0 : index
    %28 = vector.load %arg3[%c0_30, %c4_31, %c0_32, %c0_33] : memref<1x5x128x256xf32, #tpu.memory_space<vmem>>, vector<1x1x128x256xf32>
    %29 = vector.shape_cast %28 : vector<1x1x128x256xf32> to vector<128x256xf32>
    %cst_34 = arith.constant dense<0.000000e+00> : vector<32x256xf32>
    %30 = tpu.matmul %27, %29, %cst_34 {dimension_numbers = #tpu.dot_dimension_numbers<[1], [0], [0], [1], [0, 0, 1, 1], [], []>} : vector<32x128xf32>, vector<128x256xf32>, vector<32x256xf32> -> vector<32x256xf32>
    %31 = arith.addf %25, %30 : vector<32x256xf32>
    %c0_35 = arith.constant 0 : index
    %c0_36 = arith.constant 0 : index
    %c0_37 = arith.constant 0 : index
    %32 = vector.load %arg4[%c0_35, %c0_36, %c0_37] : memref<1x1x256xf32, #tpu.memory_space<vmem>>, vector<1x1x256xf32>
    %33 = vector.shape_cast %32 : vector<1x1x256xf32> to vector<1x256xf32>
    %34 = vector.broadcast %33 : vector<1x256xf32> to vector<32x256xf32>
    %35 = arith.addf %31, %34 : vector<32x256xf32>
    %36 = vector.extract_strided_slice %35 {offsets = [0, 0], sizes = [32, 128], strides = [1, 1]} : vector<32x256xf32> to vector<32x128xf32>
    %37 = vector.extract_strided_slice %35 {offsets = [0, 128], sizes = [32, 128], strides = [1, 1]} : vector<32x256xf32> to vector<32x128xf32>
    %38 = arith.negf %37 : vector<32x128xf32>
    %39 = math.exp %38 : vector<32x128xf32>
    %cst_38 = arith.constant 1.000000e+00 : f32
    %40 = vector.broadcast %cst_38 : f32 to vector<32x128xf32>
    %41 = arith.addf %40, %39 : vector<32x128xf32>
    %42 = arith.divf %40, %41 : vector<32x128xf32>
    %43 = arith.mulf %36, %42 : vector<32x128xf32>
    %c0_39 = arith.constant 0 : index
    %c0_40 = arith.constant 0 : index
    %c0_41 = arith.constant 0 : index
    %44 = vector.load %arg6[%c0_39, %c0_40, %c0_41] : memref<1x3x128xf32, #tpu.memory_space<vmem>>, vector<1x3x128xf32>
    %45 = vector.shape_cast %44 : vector<1x3x128xf32> to vector<3x128xf32>
    %c0_42 = arith.constant 0 : index
    %c0_43 = arith.constant 0 : index
    %c0_44 = arith.constant 0 : index
    %46 = vector.load %arg5[%c0_42, %c0_43, %c0_44] : memref<1x128x128xf32, #tpu.memory_space<vmem>>, vector<1x128x128xf32>
    %47 = vector.shape_cast %46 : vector<1x128x128xf32> to vector<128x128xf32>
    %cst_45 = arith.constant dense<0.000000e+00> : vector<32x128xf32>
    %48 = tpu.matmul %43, %47, %cst_45 {dimension_numbers = #tpu.dot_dimension_numbers<[1], [0], [0], [1], [0, 0, 1, 1], [], []>} : vector<32x128xf32>, vector<128x128xf32>, vector<32x128xf32> -> vector<32x128xf32>
    %49 = vector.extract_strided_slice %45 {offsets = [0, 0], sizes = [1, 128], strides = [1, 1]} : vector<3x128xf32> to vector<1x128xf32>
    %50 = vector.broadcast %49 : vector<1x128xf32> to vector<32x128xf32>
    %51 = arith.addf %48, %50 : vector<32x128xf32>
    %52 = arith.addf %15, %51 : vector<32x128xf32>
    %cst_46 = arith.constant dense<0.000000e+00> : vector<32xf32>
    %53 = vector.multi_reduction <add>, %52, %cst_46 [1] : vector<32x128xf32> to vector<32xf32>
    %54 = vector.shape_cast %53 : vector<32xf32> to vector<32x1xf32>
    %cst_47 = arith.constant 1.250000e-01 : f32
    %55 = vector.broadcast %cst_47 : f32 to vector<32x1xf32>
    %56 = arith.mulf %54, %55 : vector<32x1xf32>
    %57 = tpu.iota {dimensions = array<i32: 1>} : vector<1x128xi32>
    %c8_i32 = arith.constant 8 : i32
    %58 = vector.broadcast %c8_i32 : i32 to vector<1x128xi32>
    %59 = arith.cmpi slt, %57, %58 : vector<1x128xi32>
    %60 = arith.extui %59 : vector<1x128xi1> to vector<1x128xi32>
    %61 = arith.sitofp %60 : vector<1x128xi32> to vector<1x128xf32>
    %62 = vector.broadcast %56 : vector<32x1xf32> to vector<32x128xf32>
    %63 = arith.subf %52, %62 : vector<32x128xf32>
    %64 = vector.broadcast %61 : vector<1x128xf32> to vector<32x128xf32>
    %65 = arith.mulf %63, %64 : vector<32x128xf32>
    %66 = arith.mulf %65, %65 : vector<32x128xf32>
    %cst_48 = arith.constant dense<0.000000e+00> : vector<32xf32>
    %67 = vector.multi_reduction <add>, %66, %cst_48 [1] : vector<32x128xf32> to vector<32xf32>
    %68 = vector.shape_cast %67 : vector<32xf32> to vector<32x1xf32>
    %cst_49 = arith.constant 1.250000e-01 : f32
    %69 = vector.broadcast %cst_49 : f32 to vector<32x1xf32>
    %70 = arith.mulf %68, %69 : vector<32x1xf32>
    %cst_50 = arith.constant 9.99999974E-6 : f32
    %71 = vector.broadcast %cst_50 : f32 to vector<32x1xf32>
    %72 = arith.addf %70, %71 : vector<32x1xf32>
    %73 = math.rsqrt %72 : vector<32x1xf32>
    %74 = vector.broadcast %73 : vector<32x1xf32> to vector<32x128xf32>
    %75 = arith.mulf %65, %74 : vector<32x128xf32>
    %76 = vector.extract_strided_slice %45 {offsets = [1, 0], sizes = [1, 128], strides = [1, 1]} : vector<3x128xf32> to vector<1x128xf32>
    %77 = vector.broadcast %76 : vector<1x128xf32> to vector<32x128xf32>
    %78 = arith.mulf %75, %77 : vector<32x128xf32>
    %79 = vector.extract_strided_slice %45 {offsets = [2, 0], sizes = [1, 128], strides = [1, 1]} : vector<3x128xf32> to vector<1x128xf32>
    %80 = vector.broadcast %79 : vector<1x128xf32> to vector<32x128xf32>
    %81 = arith.addf %78, %80 : vector<32x128xf32>
    %c0_51 = arith.constant 0 : index
    %c0_52 = arith.constant 0 : index
    %c0_53 = arith.constant 0 : index
    %82 = vector.load %arg1[%c0_51, %c0_52, %c0_53] : memref<2x16x1xf32, #tpu.memory_space<vmem>>, vector<2x16x1xf32>
    %83 = vector.shape_cast %82 : vector<2x16x1xf32> to vector<32x1xf32>
    %84 = vector.broadcast %83 : vector<32x1xf32> to vector<32x128xf32>
    %85 = arith.mulf %81, %84 : vector<32x128xf32>
    %86 = vector.shape_cast %85 : vector<32x128xf32> to vector<2x16x128xf32>
    %c0_54 = arith.constant 0 : index
    %c2_55 = arith.constant 2 : index
    %c0_56 = arith.constant 0 : index
    %87 = vector.load %arg8[%c0_54, %c2_55, %c0_56] : memref<2x20x128xf32, #tpu.memory_space<vmem>>, vector<2x16x128xf32>
    tpu.vector_store %arg8[%c0_54, %c2_55, %c0_56], %86 {strides = array<i32>} : memref<2x20x128xf32, #tpu.memory_space<vmem>>, vector<2x16x128xf32>,
    %c2_i32 = arith.constant 2 : i32
    %88 = arith.cmpi eq, %arg0, %c2_i32 : i32
    %89 = arith.extui %88 : i1 to i32
    %c0_i32_57 = arith.constant 0 : i32
    %90 = arith.cmpi ne, %89, %c0_i32_57 : i32
    scf.if %90 {
      %c0_58 = arith.constant 0 : index
      %c0_59 = arith.constant 0 : index
      %c0_60 = arith.constant 0 : index
      %91 = vector.load %arg7[%c0_58, %c0_59, %c0_60] : memref<2x16x128xf32, #tpu.memory_space<vmem>>, vector<2x16x128xf32>
      tpu.vector_store %arg7[%c0_58, %c0_59, %c0_60], %86 {strides = array<i32>} : memref<2x16x128xf32, #tpu.memory_space<vmem>>, vector<2x16x128xf32>,
    } else {
    }
    return
  }
  func.func @transform_0(%arg0: i32) -> (i32, i32, i32) {
    %c0_i32 = arith.constant 0 : i32
    %c0_i32_0 = arith.constant 0 : i32
    %c0_i32_1 = arith.constant 0 : i32
    %c0_i32_2 = arith.constant 0 : i32
    return %c0_i32, %c0_i32_0, %c0_i32_1 : i32, i32, i32
  }
  func.func @transform_1(%arg0: i32) -> (i32, i32, i32) {
    %c0_i32 = arith.constant 0 : i32
    %c0_i32_0 = arith.constant 0 : i32
    %c0_i32_1 = arith.constant 0 : i32
    %c0_i32_2 = arith.constant 0 : i32
    return %c0_i32, %c0_i32_0, %c0_i32_1 : i32, i32, i32
  }
  func.func @transform_2(%arg0: i32) -> (i32, i32, i32, i32) {
    %c0_i32 = arith.constant 0 : i32
    %c0_i32_0 = arith.constant 0 : i32
    %c0_i32_1 = arith.constant 0 : i32
    %c0_i32_2 = arith.constant 0 : i32
    return %arg0, %c0_i32, %c0_i32_0, %c0_i32_1 : i32, i32, i32, i32
  }
  func.func @transform_3(%arg0: i32) -> (i32, i32, i32) {
    %c0_i32 = arith.constant 0 : i32
    %c0_i32_0 = arith.constant 0 : i32
    %c0_i32_1 = arith.constant 0 : i32
    return %arg0, %c0_i32, %c0_i32_0 : i32, i32, i32
  }
  func.func @transform_4(%arg0: i32) -> (i32, i32, i32) {
    %c0_i32 = arith.constant 0 : i32
    %c0_i32_0 = arith.constant 0 : i32
    %c0_i32_1 = arith.constant 0 : i32
    return %arg0, %c0_i32, %c0_i32_0 : i32, i32, i32
  }
  func.func @transform_5(%arg0: i32) -> (i32, i32, i32) {
    %c0_i32 = arith.constant 0 : i32
    %c0_i32_0 = arith.constant 0 : i32
    %c0_i32_1 = arith.constant 0 : i32
    return %arg0, %c0_i32, %c0_i32_0 : i32, i32, i32
  }
  func.func @transform_6(%arg0: i32) -> (i32, i32, i32) {
    %c0_i32 = arith.constant 0 : i32
    %c0_i32_0 = arith.constant 0 : i32
    %c0_i32_1 = arith.constant 0 : i32
    %c0_i32_2 = arith.constant 0 : i32
    return %c0_i32, %c0_i32_0, %c0_i32_1 : i32, i32, i32
  }
}

</mosaic_0001>

<llo_original>
// kernel: tpu_custom_call.1
$region0: #{tpu_custom_call.1}
  #allocation0 [shape = 'u32[]', space=smem, size = 0x4, offset = 0x4, fixed_abs, tag = 'smem constant byte address 0x4 - core index']
  #allocation1 [shape = 'u32[144,128]{1,0:T(1,128)}', space=vmem, size = 0x12000, scoped, tag = 'internal scratch']
  #allocation2 [shape = 'f32[2,20,128]{2,1,0:T(8,128)}', space=vmem, size = 0x6000, scoped, tag = 'scratch operand']
  %s0 = inlined_call_operand.vmem [shape: f32[2,16,1], index: 0, kind: input, shape index: {}]
  %s1 = inlined_call_operand.hbm [shape: f32[2,16,128], index: 1, kind: input, shape index: {}]
  %s2 = inlined_call_operand.hbm [shape: f32[3,5,128,256], index: 2, kind: input, shape index: {}]
  %s3 = inlined_call_operand.hbm [shape: f32[3,1,256], index: 3, kind: input, shape index: {}]
  %s4 = inlined_call_operand.hbm [shape: f32[3,128,128], index: 4, kind: input, shape index: {}]
  %s5 = inlined_call_operand.hbm [shape: f32[3,3,128], index: 5, kind: input, shape index: {}]
  %s6 = inlined_call_operand.hbm [shape: f32[2,16,128], index: 6, kind: output, shape index: {}]
  %s7 = sld [smem:[#allocation0]]
  $region85: #{tpu_custom_call.1} parent=0
    _
  %s9 = ssub.s32 1, %s7
  %s10 = scalar_select 0, %s9, %s7
  $region1: #{tpu_custom_call.1} parent=0
    #allocation3 [shape = 'u8[16384]{0}', space=vmem, size = 0x4000, scoped, tag = 'input window, operand 1, single buffered']
    #allocation4 [shape = 's32[2]{0}', space=sflag, size = 0x8, scoped, tag = 'scoped memory for tpu_custom_call.1']
    #allocation5 [shape = 's32[2]{0}', space=sflag, size = 0x8, scoped, tag = 'scoped memory for tpu_custom_call.1']
    #allocation6 [shape = 'u8[1310720]{0}', space=vmem, size = 0x140000, scoped, tag = 'input window, operand 2']
    #allocation7 [shape = 's32[2]{0}', space=sflag, size = 0x8, scoped, tag = 'scoped memory for tpu_custom_call.1']
    #allocation8 [shape = 'u8[2048]{0}', space=vmem, size = 0x800, scoped, tag = 'input window, operand 3']
    #allocation9 [shape = 'u8[131072]{0}', space=vmem, size = 0x20000, scoped, tag = 'input window, operand 4']
    #allocation10 [shape = 's32[2]{0}', space=sflag, size = 0x8, scoped, tag = 'scoped memory for tpu_custom_call.1']
    #allocation11 [shape = 'u8[4096]{0}', space=vmem, size = 0x1000, scoped, tag = 'input window, operand 5']
    #allocation12 [shape = 'u8[16384]{0}', space=vmem, size = 0x4000, scoped, tag = 'output window, operand 0, single buffered']
    %11 = vsyncpa [#allocation4], 0
    %12 = vsyncpa [#allocation7], 0
    %s13 = scalar_lea.sflag [#allocation7], 1
    %14 = vsyncpa %s13, 0
    %15 = vsyncpa [#allocation10], 0
    %s16 = scalar_lea.sflag [#allocation10], 1
    %17 = vsyncpa %s16, 0
    %18 = vsyncpa [#allocation5], 0
    loop: start=0, step=1, limit=5
    $region2: #{tpu_custom_call.1} parent=1 // loop_pre_header
      _
    $region3: #{tpu_custom_call.1} parent=1 // loop_header
      %s20 = sphi 0, %s24
      %p21 = scmp.ge.s32.totalorder %s20, 5
      %s28 = sphi 0, %s28
      %s30 = sphi 0, %s28
      %s31 = sphi 0, %s30
      %s45 = sphi 0, %s31
      %s49 = sphi 0, %s49
      %s51 = sphi 0, %s49
      %s52 = sphi 0, %s51
      %s66 = sphi 0, %s52
      %s72 = sphi 0, %s74
      %s75 = sphi 0, %s72
      %s76 = sphi 0, %s75
      %s92 = sphi 0, %s76
      %s98 = sphi 0, %s100
      %s101 = sphi 0, %s98
      %s102 = sphi 0, %s101
      %s118 = sphi 0, %s102
      %s124 = sphi 0, %s126
      %s127 = sphi 0, %s124
      %s128 = sphi 0, %s127
      %s144 = sphi 0, %s128
      %s150 = sphi 0, %s152
      %s153 = sphi 0, %s150
      %s154 = sphi 0, %s153
      %s170 = sphi 0, %s154
      %s174 = sphi 0, %s174
      %s176 = sphi 0, %s174
      %s177 = sphi 0, %s176
      %s191 = sphi 0, %s177
    $region4: #{tpu_custom_call.1} parent=1 // loop_header_branch
      %23 = sbr.rel (%p21) target = $region8
    $region5: #{tpu_custom_call.1} parent=1 // loop_body
      %s25 = ssub.s32 %s20, 1
      %s26 = ssub.s32 %s20, 2
      %s27 = sadd.s32 %s20, 1
      %s29 = sadd.s32 %s28, 1
      %p32 = scmp.eq.s32.totalorder %s20, 2
      %p33 = scmp.ne.s32.totalorder %s28, %s30
      %p34 = scmp.eq.s32.totalorder %s20, 0
      %p35 = por %p33, %p34
      %p36 = scmp.ne.s32.totalorder %s28, %s30
      %p37 = scmp.eq.s32.totalorder %s25, 2
      %p38 = por %p36, %p37
      %p39 = scmp.ne.s32.totalorder %s30, %s31
      %p40 = scmp.eq.s32.totalorder %s25, 0
      %p41 = por %p39, %p40
      %p42 = scmp.ne.s32.totalorder %s30, %s31
      %p43 = scmp.eq.s32.totalorder %s26, 2
      %p44 = por %p42, %p43
      %p46 = scmp.ne.s32.totalorder %s31, %s45
      %p47 = scmp.eq.s32.totalorder %s26, 0
      %p48 = por %p46, %p47
      %s50 = sadd.s32 %s49, 1
      %p53 = scmp.eq.s32.totalorder %s20, 2
      %p54 = scmp.ne.s32.totalorder %s49, %s51
      %p55 = scmp.eq.s32.totalorder %s20, 0
      %p56 = por %p54, %p55
      %p57 = scmp.ne.s32.totalorder %s49, %s51
      %p58 = scmp.eq.s32.totalorder %s25, 2
      %p59 = por %p57, %p58
      %p60 = scmp.ne.s32.totalorder %s51, %s52
      %p61 = scmp.eq.s32.totalorder %s25, 0
      %p62 = por %p60, %p61
      %p63 = scmp.ne.s32.totalorder %s51, %s52
      %p64 = scmp.eq.s32.totalorder %s26, 2
      %p65 = por %p63, %p64
      %p67 = scmp.ne.s32.totalorder %s52, %s66
      %p68 = scmp.eq.s32.totalorder %s26, 0
      %p69 = por %p67, %p68
      %s70 = ssub.s32 %s20, %s27
      %p71 = scmp.eq.s32.totalorder %s70, 0
      %s73 = sadd.s32 %s72, 1
      %s74 = scalar_select %p71, %s72, %s73
      %p77 = pneg %p71
      %p78 = scmp.eq.s32.totalorder %s20, 2
      %p79 = por %p77, %p78
      %p80 = scmp.ne.s32.totalorder %s72, %s75
      %p81 = scmp.eq.s32.totalorder %s20, 0
      %p82 = por %p80, %p81
      %p83 = scmp.ne.s32.totalorder %s72, %s75
      %p84 = scmp.eq.s32.totalorder %s25, 2
      %p85 = por %p83, %p84
      %p86 = scmp.ne.s32.totalorder %s75, %s76
      %p87 = scmp.eq.s32.totalorder %s25, 0
      %p88 = por %p86, %p87
      %p89 = scmp.ne.s32.totalorder %s75, %s76
      %p90 = scmp.eq.s32.totalorder %s26, 2
      %p91 = por %p89, %p90
      %p93 = scmp.ne.s32.totalorder %s76, %s92
      %p94 = scmp.eq.s32.totalorder %s26, 0
      %p95 = por %p93, %p94
      %s96 = ssub.s32 %s20, %s27
      %p97 = scmp.eq.s32.totalorder %s96, 0
      %s99 = sadd.s32 %s98, 1
      %s100 = scalar_select %p97, %s98, %s99
      %p103 = pneg %p97
      %p104 = scmp.eq.s32.totalorder %s20, 2
      %p105 = por %p103, %p104
      %p106 = scmp.ne.s32.totalorder %s98, %s101
      %p107 = scmp.eq.s32.totalorder %s20, 0
      %p108 = por %p106, %p107
      %p109 = scmp.ne.s32.totalorder %s98, %s101
      %p110 = scmp.eq.s32.totalorder %s25, 2
      %p111 = por %p109, %p110
      %p112 = scmp.ne.s32.totalorder %s101, %s102
      %p113 = scmp.eq.s32.totalorder %s25, 0
      %p114 = por %p112, %p113
      %p115 = scmp.ne.s32.totalorder %s101, %s102
      %p116 = scmp.eq.s32.totalorder %s26, 2
      %p117 = por %p115, %p116
      %p119 = scmp.ne.s32.totalorder %s102, %s118
      %p120 = scmp.eq.s32.totalorder %s26, 0
      %p121 = por %p119, %p120
      %s122 = ssub.s32 %s20, %s27
      %p123 = scmp.eq.s32.totalorder %s122, 0
      %s125 = sadd.s32 %s124, 1
      %s126 = scalar_select %p123, %s124, %s125
      %p129 = pneg %p123
      %p130 = scmp.eq.s32.totalorder %s20, 2
      %p131 = por %p129, %p130
      %p132 = scmp.ne.s32.totalorder %s124, %s127
      %p133 = scmp.eq.s32.totalorder %s20, 0
      %p134 = por %p132, %p133
      %p135 = scmp.ne.s32.totalorder %s124, %s127
      %p136 = scmp.eq.s32.totalorder %s25, 2
      %p137 = por %p135, %p136
      %p138 = scmp.ne.s32.totalorder %s127, %s128
      %p139 = scmp.eq.s32.totalorder %s25, 0
      %p140 = por %p138, %p139
      %p141 = scmp.ne.s32.totalorder %s127, %s128
      %p142 = scmp.eq.s32.totalorder %s26, 2
      %p143 = por %p141, %p142
      %p145 = scmp.ne.s32.totalorder %s128, %s144
      %p146 = scmp.eq.s32.totalorder %s26, 0
      %p147 = por %p145, %p146
      %s148 = ssub.s32 %s20, %s27
      %p149 = scmp.eq.s32.totalorder %s148, 0
      %s151 = sadd.s32 %s150, 1
      %s152 = scalar_select %p149, %s150, %s151
      %p155 = pneg %p149
      %p156 = scmp.eq.s32.totalorder %s20, 2
      %p157 = por %p155, %p156
      %p158 = scmp.ne.s32.totalorder %s150, %s153
      %p159 = scmp.eq.s32.totalorder %s20, 0
      %p160 = por %p158, %p159
      %p161 = scmp.ne.s32.totalorder %s150, %s153
      %p162 = scmp.eq.s32.totalorder %s25, 2
      %p163 = por %p161, %p162
      %p164 = scmp.ne.s32.totalorder %s153, %s154
      %p165 = scmp.eq.s32.totalorder %s25, 0
      %p166 = por %p164, %p165
      %p167 = scmp.ne.s32.totalorder %s153, %s154
      %p168 = scmp.eq.s32.totalorder %s26, 2
      %p169 = por %p167, %p168
      %p171 = scmp.ne.s32.totalorder %s154, %s170
      %p172 = scmp.eq.s32.totalorder %s26, 0
      %p173 = por %p171, %p172
      %s175 = sadd.s32 %s174, 1
      %p178 = scmp.eq.s32.totalorder %s20, 2
      %p179 = scmp.ne.s32.totalorder %s174, %s176
      %p180 = scmp.eq.s32.totalorder %s20, 0
      %p181 = por %p179, %p180
      %p182 = scmp.ne.s32.totalorder %s174, %s176
      %p183 = scmp.eq.s32.totalorder %s25, 2
      %p184 = por %p182, %p183
      %p185 = scmp.ne.s32.totalorder %s176, %s177
      %p186 = scmp.eq.s32.totalorder %s25, 0
      %p187 = por %p185, %p186
      %p188 = scmp.ne.s32.totalorder %s176, %s177
      %p189 = scmp.eq.s32.totalorder %s26, 2
      %p190 = por %p188, %p189
      %p192 = scmp.ne.s32.totalorder %s177, %s191
      %p193 = scmp.eq.s32.totalorder %s26, 0
      %p194 = por %p192, %p193
      %p195 = scmp.le.s32.totalorder 1, %s20
      %p196 = scmp.lt.s32.totalorder %s20, 4
      %p197 = pnand %p195, %p196
      %p198 = pneg %p197
      // Predicated region
      $region9: #{tpu_custom_call.1} parent=5 // pred_check
        _
      $region10: #{tpu_custom_call.1} parent=5 // pred_check_branch
        %200 = sbr.rel (%p197) target = $region12
      $region11: #{tpu_custom_call.1} parent=5 // pred_region
        %s201 = ssub.s32 %s20, 1
        // Predicated region
        $region13: #{tpu_custom_call.1} parent=11 // pred_check
          %p202 = pneg %p41
        $region14: #{tpu_custom_call.1} parent=11 // pred_check_branch
          %204 = sbr.rel (%p202) target = $region16
        $region15: #{tpu_custom_call.1} parent=11 // pred_region
          _
        $region16: #{tpu_custom_call.1} parent=11 // pred_fallthru
          _
        // Predicated region
        $region17: #{tpu_custom_call.1} parent=11 // pred_check
          %p205 = pneg %p62
        $region18: #{tpu_custom_call.1} parent=11 // pred_check_branch
          %207 = sbr.rel (%p205) target = $region20
        $region19: #{tpu_custom_call.1} parent=11 // pred_region
          %s209 = ssub.s32 512, 512
          %210 = vsyncadd [#allocation4], %s209
          %s211 = sshll.u32 [#allocation3], 4
          %s212 = int_to_ptr.vmem [resolvable:$true] %s211
          %217 = dma.hbm_to_vmem [thread:$0]  %s1, 512, %s212, [#allocation4], 128, 128, 8
        $region20: #{tpu_custom_call.1} parent=11 // pred_fallthru
          _
      $region12: #{tpu_custom_call.1} parent=5 // pred_fallthru
        _
      %p218 = scmp.lt.s32.totalorder %s20, 3
      // Predicated region
      $region21: #{tpu_custom_call.1} parent=5 // pred_check
        %p219 = pneg %p218
      $region22: #{tpu_custom_call.1} parent=5 // pred_check_branch
        %221 = sbr.rel (%p219) target = $region24
      $region23: #{tpu_custom_call.1} parent=5 // pred_region
        // Predicated region
        $region25: #{tpu_custom_call.1} parent=23 // pred_check
          %p222 = pneg %p82
        $region26: #{tpu_custom_call.1} parent=23 // pred_check_branch
          %224 = sbr.rel (%p222) target = $region28
        $region27: #{tpu_custom_call.1} parent=23 // pred_region
          %s225 = sand.u32 %s20, 1
          %s226 = scalar_lea.sflag [#allocation7], %s225
          %s227 = sand.u32 %s72, 1
          %s228 = smul.addr %s227, 1280
          %s229 = scalar_lea.vmem [#allocation6], %s228
          %s231 = ssub.s32 20480, 20480
          %232 = vsyncadd %s226, %s231
          %s233 = smul.addr %s20, 160
          %s234 = smul.addr %s233, 128
          %s235 = scalar_lea.hbm %s2, %s234
          %s236 = sshll.u32 %s229, 4
          %s237 = int_to_ptr.vmem [resolvable:$true] %s236
          %242 = dma.hbm_to_vmem [thread:$0]  %s235, 20480, %s237, %s226, 256, 256, 16
        $region28: #{tpu_custom_call.1} parent=23 // pred_fallthru
          _
        // Predicated region
        $region29: #{tpu_custom_call.1} parent=23 // pred_check
          %p243 = pneg %p108
        $region30: #{tpu_custom_call.1} parent=23 // pred_check_branch
          %245 = sbr.rel (%p243) target = $region32
        $region31: #{tpu_custom_call.1} parent=23 // pred_region
          %s246 = sand.u32 %s20, 1
          %s247 = scalar_lea.sflag [#allocation7], %s246
          %s248 = sand.u32 %s98, 1
          %s249 = smul.addr %s248, 2
          %s250 = scalar_lea.vmem [#allocation8], %s249
          %s252 = ssub.s32 32, 32
          %253 = vsyncadd %s247, %s252
          %s254 = smul.addr %s20, 2
          %s255 = smul.addr %s254, 16
          %s256 = scalar_lea.hbm %s3, %s255
          %s258 = sshll.u32 %s250, 4
          %s259 = int_to_ptr.vmem [resolvable:$true] %s258
          %261 = dma.hbm_to_vmem [thread:$0]  %s256, 32, %s259, %s247
        $region32: #{tpu_custom_call.1} parent=23 // pred_fallthru
          _
        // Predicated region
        $region33: #{tpu_custom_call.1} parent=23 // pred_check
          %p262 = pneg %p134
        $region34: #{tpu_custom_call.1} parent=23 // pred_check_branch
          %264 = sbr.rel (%p262) target = $region36
        $region35: #{tpu_custom_call.1} parent=23 // pred_region
          %s265 = sand.u32 %s20, 1
          %s266 = scalar_lea.sflag [#allocation10], %s265
          %s267 = sand.u32 %s124, 1
          %s268 = smul.addr %s267, 128
          %s269 = scalar_lea.vmem [#allocation9], %s268
          %s271 = ssub.s32 2048, 2048
          %272 = vsyncadd %s266, %s271
          %s273 = smul.addr %s20, 16
          %s274 = smul.addr %s273, 128
          %s275 = scalar_lea.hbm %s4, %s274
          %s276 = sshll.u32 %s269, 4
          %s277 = int_to_ptr.vmem [resolvable:$true] %s276
          %282 = dma.hbm_to_vmem [thread:$0]  %s275, 2048, %s277, %s266, 128, 128, 8
        $region36: #{tpu_custom_call.1} parent=23 // pred_fallthru
          _
        // Predicated region
        $region37: #{tpu_custom_call.1} parent=23 // pred_check
          %p283 = pneg %p160
        $region38: #{tpu_custom_call.1} parent=23 // pred_check_branch
          %285 = sbr.rel (%p283) target = $region40
        $region39: #{tpu_custom_call.1} parent=23 // pred_region
          %s286 = sand.u32 %s20, 1
          %s287 = scalar_lea.sflag [#allocation10], %s286
          %s288 = sand.u32 %s150, 1
          %s289 = smul.addr %s288, 4
          %s290 = scalar_lea.vmem [#allocation11], %s289
          %s292 = ssub.s32 64, 64
          %293 = vsyncadd %s287, %s292
          %s294 = smul.addr %s20, 64
          %s295 = scalar_lea.hbm %s5, %s294
          %s297 = sshll.u32 %s290, 4
          %s298 = int_to_ptr.vmem [resolvable:$true] %s297
          %300 = dma.hbm_to_vmem [thread:$0]  %s295, 64, %s298, %s287
        $region40: #{tpu_custom_call.1} parent=23 // pred_fallthru
          _
      $region24: #{tpu_custom_call.1} parent=5 // pred_fallthru
        _
      %p301 = scmp.le.s32.totalorder 1, %s20
      %p302 = scmp.lt.s32.totalorder %s20, 4
      %p303 = pnand %p301, %p302
      %p304 = pneg %p303
      // Predicated region
      $region41: #{tpu_custom_call.1} parent=5 // pred_check
        _
      $region42: #{tpu_custom_call.1} parent=5 // pred_check_branch
        %306 = sbr.rel (%p303) target = $region44
      $region43: #{tpu_custom_call.1} parent=5 // pred_region
        %s307 = ssub.s32 %s20, 1
        // Predicated region
        $region45: #{tpu_custom_call.1} parent=43 // pred_check
          %p308 = pneg %p62
        $region46: #{tpu_custom_call.1} parent=43 // pred_check_branch
          %310 = sbr.rel (%p308) target = $region48
        $region47: #{tpu_custom_call.1} parent=43 // pred_region
          %311 = dma.done [#allocation4], 512
        $region48: #{tpu_custom_call.1} parent=43 // pred_fallthru
          _
        %s312 = sand.u32 %s25, 1
        %s313 = scalar_lea.sflag [#allocation7], %s312
        %s314 = sand.u32 %s75, 1
        %s315 = smul.addr %s314, 1280
        %s316 = scalar_lea.vmem [#allocation6], %s315
        // Predicated region
        $region49: #{tpu_custom_call.1} parent=43 // pred_check
          %p317 = pneg %p88
        $region50: #{tpu_custom_call.1} parent=43 // pred_check_branch
          %319 = sbr.rel (%p317) target = $region52
        $region51: #{tpu_custom_call.1} parent=43 // pred_region
          %320 = dma.done %s313, 20480
        $region52: #{tpu_custom_call.1} parent=43 // pred_fallthru
          _
        %s321 = sand.u32 %s25, 1
        %s322 = scalar_lea.sflag [#allocation7], %s321
        %s323 = sand.u32 %s101, 1
        %s324 = smul.addr %s323, 2
        %s325 = scalar_lea.vmem [#allocation8], %s324
        // Predicated region
        $region53: #{tpu_custom_call.1} parent=43 // pred_check
          %p326 = pneg %p114
        $region54: #{tpu_custom_call.1} parent=43 // pred_check_branch
          %328 = sbr.rel (%p326) target = $region56
        $region55: #{tpu_custom_call.1} parent=43 // pred_region
          %329 = dma.done %s322, 32
        $region56: #{tpu_custom_call.1} parent=43 // pred_fallthru
          _
        %s330 = sand.u32 %s25, 1
        %s331 = scalar_lea.sflag [#allocation10], %s330
        %s332 = sand.u32 %s127, 1
        %s333 = smul.addr %s332, 128
        %s334 = scalar_lea.vmem [#allocation9], %s333
        // Predicated region
        $region57: #{tpu_custom_call.1} parent=43 // pred_check
          %p335 = pneg %p140
        $region58: #{tpu_custom_call.1} parent=43 // pred_check_branch
          %337 = sbr.rel (%p335) target = $region60
        $region59: #{tpu_custom_call.1} parent=43 // pred_region
          %338 = dma.done %s331, 2048
        $region60: #{tpu_custom_call.1} parent=43 // pred_fallthru
          _
        %s339 = sand.u32 %s25, 1
        %s340 = scalar_lea.sflag [#allocation10], %s339
        %s341 = sand.u32 %s153, 1
        %s342 = smul.addr %s341, 4
        %s343 = scalar_lea.vmem [#allocation11], %s342
        // Predicated region
        $region61: #{tpu_custom_call.1} parent=43 // pred_check
          %p344 = pneg %p166
        $region62: #{tpu_custom_call.1} parent=43 // pred_check_branch
          %346 = sbr.rel (%p344) target = $region64
        $region63: #{tpu_custom_call.1} parent=43 // pred_region
          %347 = dma.done %s340, 64
        $region64: #{tpu_custom_call.1} parent=43 // pred_fallthru
          _
        %p348 = pneg %p41
        %p349 = pneg %p38
        %p350 = pneg %p62
        %p351 = pneg %p59
        %s352 = sand.u32 %s25, 1
        %s353 = scalar_lea.sflag [#allocation7], %s352
        %s354 = sand.u32 %s75, 1
        %s355 = smul.addr %s354, 1280
        %s356 = scalar_lea.vmem [#allocation6], %s355
        %p357 = pneg %p88
        %p358 = pneg %p85
        %s359 = sand.u32 %s25, 1
        %s360 = scalar_lea.sflag [#allocation7], %s359
        %s361 = sand.u32 %s101, 1
        %s362 = smul.addr %s361, 2
        %s363 = scalar_lea.vmem [#allocation8], %s362
        %p364 = pneg %p114
        %p365 = pneg %p111
        %s366 = sand.u32 %s25, 1
        %s367 = scalar_lea.sflag [#allocation10], %s366
        %s368 = sand.u32 %s127, 1
        %s369 = smul.addr %s368, 128
        %s370 = scalar_lea.vmem [#allocation9], %s369
        %p371 = pneg %p140
        %p372 = pneg %p137
        %s373 = sand.u32 %s25, 1
        %s374 = scalar_lea.sflag [#allocation10], %s373
        %s375 = sand.u32 %s153, 1
        %s376 = smul.addr %s375, 4
        %s377 = scalar_lea.vmem [#allocation11], %s376
        %p378 = pneg %p166
        %p379 = pneg %p163
        %p380 = pneg %p187
        %p381 = pneg %p184
        %p382 = scmp.eq.s32.totalorder %s25, 0
        // Predicated region
        $region65: #{tpu_custom_call.1} parent=43 // pred_check
          %p383 = pneg %p382
        $region66: #{tpu_custom_call.1} parent=43 // pred_check_branch
          %385 = sbr.rel (%p383) target = $region68
        $region67: #{tpu_custom_call.1} parent=43 // pred_region
          %386 = vst [vmem:[#allocation2] sm:$0xff] 0.0
          %387 = vst [vmem:[#allocation2 + $0x8] sm:$0xff] 0.0
          %388 = vst [vmem:[#allocation2 + $0x10] sm:$0xf] 0.0
          %389 = vst [vmem:[#allocation2 + $0x18] sm:$0xff] 0.0
          %390 = vst [vmem:[#allocation2 + $0x20] sm:$0xff] 0.0
          %391 = vst [vmem:[#allocation2 + $0x28] sm:$0xf] 0.0
          %v392 = vld [vmem:[#allocation3] sm:$0xff]
          %v393 = vld [vmem:[#allocation3 + $0x8] sm:$0xff]
          %v394 = vld [vmem:[#allocation3 + $0x10] sm:$0xff]
          %v395 = vld [vmem:[#allocation3 + $0x18] sm:$0xff]
          %v396 = vld [vmem:[%s0] sm:$0xff]
          %v397 = vld [vmem:[%s0 + $0x8] sm:$0xff]
          %v398 = vld [vmem:[%s0 + $0x10] sm:$0xff]
          %v399 = vld [vmem:[%s0 + $0x18] sm:$0xff]
          %401 = vset.pattern.permute.xlu0 0
          %402 = vperm.xlu0 %401, %v396
          %v403 = vpop.permute.xlu0 %402
          %406 = vset.pattern.permute.xlu0 0
          %407 = vperm.xlu0 %406, %v397
          %v408 = vpop.permute.xlu0 %407
          %411 = vset.pattern.permute.xlu0 0
          %412 = vperm.xlu0 %411, %v398
          %v413 = vpop.permute.xlu0 %412
          %416 = vset.pattern.permute.xlu0 0
          %417 = vperm.xlu0 %416, %v399
          %v418 = vpop.permute.xlu0 %417
          %v420 = vmul.f32 %v392, %v403
          %v421 = vmul.f32 %v393, %v408
          %v422 = vmul.f32 %v394, %v413
          %v423 = vmul.f32 %v395, %v418
          %424 = vst [vmem:[#allocation2 + $0x2] sm:$0xff] %v420
          %425 = vst [vmem:[#allocation2 + $0xa] sm:$0xff] %v421
          %426 = vst [vmem:[#allocation2 + $0x1a] sm:$0xff] %v422
          %427 = vst [vmem:[#allocation2 + $0x22] sm:$0xff] %v423
        $region68: #{tpu_custom_call.1} parent=43 // pred_fallthru
          _
        %v428 = vld [vmem:[#allocation2] sm:$0xff]
        %v429 = vld [vmem:[#allocation2 + $0x8] sm:$0xff]
        %v430 = vld [vmem:[#allocation2 + $0x18] sm:$0xff]
        %v431 = vld [vmem:[#allocation2 + $0x20] sm:$0xff]
        %v432 = vld [vmem:[%s316] sm:$0xff]
        %v433 = vld [vmem:[%s316 + $0x8] sm:$0xff]
        %v434 = vld [vmem:[%s316 + $0x10] sm:$0xff]
        %v435 = vld [vmem:[%s316 + $0x18] sm:$0xff]
        %v436 = vld [vmem:[%s316 + $0x20] sm:$0xff]
        %v437 = vld [vmem:[%s316 + $0x28] sm:$0xff]
        %v438 = vld [vmem:[%s316 + $0x30] sm:$0xff]
        %v439 = vld [vmem:[%s316 + $0x38] sm:$0xff]
        %v440 = vld [vmem:[%s316 + $0x40] sm:$0xff]
        %v441 = vld [vmem:[%s316 + $0x48] sm:$0xff]
        %v442 = vld [vmem:[%s316 + $0x50] sm:$0xff]
        %v443 = vld [vmem:[%s316 + $0x58] sm:$0xff]
        %v444 = vld [vmem:[%s316 + $0x60] sm:$0xff]
        %v445 = vld [vmem:[%s316 + $0x68] sm:$0xff]
        %v446 = vld [vmem:[%s316 + $0x70] sm:$0xff]
        %v447 = vld [vmem:[%s316 + $0x78] sm:$0xff]
        %v448 = vld [vmem:[%s316 + $0x80] sm:$0xff]
        %v449 = vld [vmem:[%s316 + $0x88] sm:$0xff]
        %v450 = vld [vmem:[%s316 + $0x90] sm:$0xff]
        %v451 = vld [vmem:[%s316 + $0x98] sm:$0xff]
        %v452 = vld [vmem:[%s316 + $0xa0] sm:$0xff]
        %v453 = vld [vmem:[%s316 + $0xa8] sm:$0xff]
        %v454 = vld [vmem:[%s316 + $0xb0] sm:$0xff]
        %v455 = vld [vmem:[%s316 + $0xb8] sm:$0xff]
        %v456 = vld [vmem:[%s316 + $0xc0] sm:$0xff]
        %v457 = vld [vmem:[%s316 + $0xc8] sm:$0xff]
        %v458 = vld [vmem:[%s316 + $0xd0] sm:$0xff]
        %v459 = vld [vmem:[%s316 + $0xd8] sm:$0xff]
        %v460 = vld [vmem:[%s316 + $0xe0] sm:$0xff]
        %v461 = vld [vmem:[%s316 + $0xe8] sm:$0xff]
        %v462 = vld [vmem:[%s316 + $0xf0] sm:$0xff]
        %v463 = vld [vmem:[%s316 + $0xf8] sm:$0xff]
        %v464 = vld [vmem:[#allocation2 + $0x1] sm:$0xff]
        %v465 = vld [vmem:[#allocation2 + $0x9] sm:$0xff]
        %v466 = vld [vmem:[#allocation2 + $0x19] sm:$0xff]
        %v467 = vld [vmem:[#allocation2 + $0x21] sm:$0xff]
        %s468 = scalar_lea.vmem %s316, 256 [#allocation6]
        %v469 = vld [vmem:[%s468] sm:$0xff]
        %v470 = vld [vmem:[%s468 + $0x8] sm:$0xff]
        %v471 = vld [vmem:[%s468 + $0x10] sm:$0xff]
        %v472 = vld [vmem:[%s468 + $0x18] sm:$0xff]
        %v473 = vld [vmem:[%s468 + $0x20] sm:$0xff]
        %v474 = vld [vmem:[%s468 + $0x28] sm:$0xff]
        %v475 = vld [vmem:[%s468 + $0x30] sm:$0xff]
        %v476 = vld [vmem:[%s468 + $0x38] sm:$0xff]
        %v477 = vld [vmem:[%s468 + $0x40] sm:$0xff]
        %v478 = vld [vmem:[%s468 + $0x48] sm:$0xff]
        %v479 = vld [vmem:[%s468 + $0x50] sm:$0xff]
        %v480 = vld [vmem:[%s468 + $0x58] sm:$0xff]
        %v481 = vld [vmem:[%s468 + $0x60] sm:$0xff]
        %v482 = vld [vmem:[%s468 + $0x68] sm:$0xff]
        %v483 = vld [vmem:[%s468 + $0x70] sm:$0xff]
        %v484 = vld [vmem:[%s468 + $0x78] sm:$0xff]
        %v485 = vld [vmem:[%s468 + $0x80] sm:$0xff]
        %v486 = vld [vmem:[%s468 + $0x88] sm:$0xff]
        %v487 = vld [vmem:[%s468 + $0x90] sm:$0xff]
        %v488 = vld [vmem:[%s468 + $0x98] sm:$0xff]
        %v489 = vld [vmem:[%s468 + $0xa0] sm:$0xff]
        %v490 = vld [vmem:[%s468 + $0xa8] sm:$0xff]
        %v491 = vld [vmem:[%s468 + $0xb0] sm:$0xff]
        %v492 = vld [vmem:[%s468 + $0xb8] sm:$0xff]
        %v493 = vld [vmem:[%s468 + $0xc0] sm:$0xff]
        %v494 = vld [vmem:[%s468 + $0xc8] sm:$0xff]
        %v495 = vld [vmem:[%s468 + $0xd0] sm:$0xff]
        %v496 = vld [vmem:[%s468 + $0xd8] sm:$0xff]
        %v497 = vld [vmem:[%s468 + $0xe0] sm:$0xff]
        %v498 = vld [vmem:[%s468 + $0xe8] sm:$0xff]
        %v499 = vld [vmem:[%s468 + $0xf0] sm:$0xff]
        %v500 = vld [vmem:[%s468 + $0xf8] sm:$0xff]
        %501 = vmatprep.subr.mxu0 %v500
        %502 = vmatpush1.msra.mxu0 %v499
        %503 = vmatprep.subr.mxu0 %v498
        %504 = vmatpush1.msra.mxu0 %v497
        %505 = vmatprep.subr.mxu0 %v496
        %506 = vmatpush1.msra.mxu0 %v495
        %507 = vmatprep.subr.mxu0 %v494
        %508 = vmatpush1.msra.mxu0 %v493
        %509 = vmatprep.subr.mxu0 %v492
        %510 = vmatpush1.msra.mxu0 %v491
        %511 = vmatprep.subr.mxu0 %v490
        %512 = vmatpush1.msra.mxu0 %v489
        %513 = vmatprep.subr.mxu0 %v488
        %514 = vmatpush1.msra.mxu0 %v487
        %515 = vmatprep.subr.mxu0 %v486
        %516 = vmatpush1.msra.mxu0 %v485
        %517 = vmatprep.subr.mxu0 %v484
        %518 = vmatpush1.msra.mxu0 %v483
        %519 = vmatprep.subr.mxu0 %v482
        %520 = vmatpush1.msra.mxu0 %v481
        %521 = vmatprep.subr.mxu0 %v480
        %522 = vmatpush1.msra.mxu0 %v479
        %523 = vmatprep.subr.mxu0 %v478
        %524 = vmatpush1.msra.mxu0 %v477
        %525 = vmatprep.subr.mxu0 %v476
        %526 = vmatpush1.msra.mxu0 %v475
        %527 = vmatprep.subr.mxu0 %v474
        %528 = vmatpush1.msra.mxu0 %v473
        %529 = vmatprep.subr.mxu0 %v472
        %530 = vmatpush1.msra.mxu0 %v471
        %531 = vmatprep.subr.mxu0 %v470
        %532 = vmatpush1.msra.mxu0 %v469
        %533 = vmatprep.subr.mxu0 0.0
        %534 = vmatpush2.msra.mxu0 0.0
        %535 = vmatprep.subr.mxu0 0.0
        %536 = vmatpush2.msra.mxu0 0.0
        %537 = vmatprep.subr.mxu0 0.0
        %538 = vmatpush2.msra.mxu0 0.0
        %539 = vmatprep.subr.mxu0 0.0
        %540 = vmatpush2.msra.mxu0 0.0
        %541 = vmatprep.subr.mxu0 0.0
        %542 = vmatpush2.msra.mxu0 0.0
        %543 = vmatprep.subr.mxu0 0.0
        %544 = vmatpush2.msra.mxu0 0.0
        %545 = vmatprep.subr.mxu0 0.0
        %546 = vmatpush2.msra.mxu0 0.0
        %547 = vmatprep.subr.mxu0 0.0
        %548 = vmatpush2.msra.mxu0 0.0
        %549 = vmatprep.subr.mxu0 0.0
        %550 = vmatpush2.msra.mxu0 0.0
        %551 = vmatprep.subr.mxu0 0.0
        %552 = vmatpush2.msra.mxu0 0.0
        %553 = vmatprep.subr.mxu0 0.0
        %554 = vmatpush2.msra.mxu0 0.0
        %555 = vmatprep.subr.mxu0 0.0
        %556 = vmatpush2.msra.mxu0 0.0
        %557 = vmatprep.subr.mxu0 0.0
        %558 = vmatpush2.msra.mxu0 0.0
        %559 = vmatprep.subr.mxu0 0.0
        %560 = vmatpush2.msra.mxu0 0.0
        %561 = vmatprep.subr.mxu0 0.0
        %562 = vmatpush2.msra.mxu0 0.0
        %563 = vmatprep.subr.mxu0 0.0
        %564 = vmatpush2.msra.mxu0 0.0
        %565 = vmatprep.mubr.f32.mxu0 0.0
        %566 = vmatmul.mubr.f32.gmra.mxu0 %v464
        %v567 = vpop.f32.mrf.mxu0
        %v568 = vadd.f32 0.0, %v567
        %v569 = vpop.f32.mrf.mxu0
        %v570 = vadd.f32 0.0, %v569
        %571 = vmatprep.mubr.f32.mxu0 0.0
        %572 = vmatmul.mubr.f32.gmra.mxu0 %v465
        %v573 = vpop.f32.mrf.mxu0
        %v574 = vadd.f32 0.0, %v573
        %v575 = vpop.f32.mrf.mxu0
        %v576 = vadd.f32 0.0, %v575
        %577 = vmatprep.mubr.f32.mxu0 0.0
        %578 = vmatmul.mubr.f32.gmra.mxu0 %v466
        %v579 = vpop.f32.mrf.mxu0
        %v580 = vadd.f32 0.0, %v579
        %v581 = vpop.f32.mrf.mxu0
        %v582 = vadd.f32 0.0, %v581
        %583 = vmatprep.mubr.f32.mxu0 0.0
        %584 = vmatmul.mubr.f32.gmra.mxu0 %v467
        %v585 = vpop.f32.mrf.mxu0
        %v586 = vadd.f32 0.0, %v585
        %v587 = vpop.f32.mrf.mxu0
        %v588 = vadd.f32 0.0, %v587
        %589 = vdwg.mxu0
        %590 = vmatprep.subr.mxu0 %v463
        %591 = vmatpush1.msra.mxu0 %v462
        %592 = vmatprep.subr.mxu0 %v461
        %593 = vmatpush1.msra.mxu0 %v460
        %594 = vmatprep.subr.mxu0 %v459
        %595 = vmatpush1.msra.mxu0 %v458
        %596 = vmatprep.subr.mxu0 %v457
        %597 = vmatpush1.msra.mxu0 %v456
        %598 = vmatprep.subr.mxu0 %v455
        %599 = vmatpush1.msra.mxu0 %v454
        %600 = vmatprep.subr.mxu0 %v453
        %601 = vmatpush1.msra.mxu0 %v452
        %602 = vmatprep.subr.mxu0 %v451
        %603 = vmatpush1.msra.mxu0 %v450
        %604 = vmatprep.subr.mxu0 %v449
        %605 = vmatpush1.msra.mxu0 %v448
        %606 = vmatprep.subr.mxu0 %v447
        %607 = vmatpush1.msra.mxu0 %v446
        %608 = vmatprep.subr.mxu0 %v445
        %609 = vmatpush1.msra.mxu0 %v444
        %610 = vmatprep.subr.mxu0 %v443
        %611 = vmatpush1.msra.mxu0 %v442
        %612 = vmatprep.subr.mxu0 %v441
        %613 = vmatpush1.msra.mxu0 %v440
        %614 = vmatprep.subr.mxu0 %v439
        %615 = vmatpush1.msra.mxu0 %v438
        %616 = vmatprep.subr.mxu0 %v437
        %617 = vmatpush1.msra.mxu0 %v436
        %618 = vmatprep.subr.mxu0 %v435
        %619 = vmatpush1.msra.mxu0 %v434
        %620 = vmatprep.subr.mxu0 %v433
        %621 = vmatpush1.msra.mxu0 %v432
        %622 = vmatprep.subr.mxu0 0.0
        %623 = vmatpush2.msra.mxu0 0.0
        %624 = vmatprep.subr.mxu0 0.0
        %625 = vmatpush2.msra.mxu0 0.0
        %626 = vmatprep.subr.mxu0 0.0
        %627 = vmatpush2.msra.mxu0 0.0
        %628 = vmatprep.subr.mxu0 0.0
        %629 = vmatpush2.msra.mxu0 0.0
        %630 = vmatprep.subr.mxu0 0.0
        %631 = vmatpush2.msra.mxu0 0.0
        %632 = vmatprep.subr.mxu0 0.0
        %633 = vmatpush2.msra.mxu0 0.0
        %634 = vmatprep.subr.mxu0 0.0
        %635 = vmatpush2.msra.mxu0 0.0
        %636 = vmatprep.subr.mxu0 0.0
        %637 = vmatpush2.msra.mxu0 0.0
        %638 = vmatprep.subr.mxu0 0.0
        %639 = vmatpush2.msra.mxu0 0.0
        %640 = vmatprep.subr.mxu0 0.0
        %641 = vmatpush2.msra.mxu0 0.0
        %642 = vmatprep.subr.mxu0 0.0
        %643 = vmatpush2.msra.mxu0 0.0
        %644 = vmatprep.subr.mxu0 0.0
        %645 = vmatpush2.msra.mxu0 0.0
        %646 = vmatprep.subr.mxu0 0.0
        %647 = vmatpush2.msra.mxu0 0.0
        %648 = vmatprep.subr.mxu0 0.0
        %649 = vmatpush2.msra.mxu0 0.0
        %650 = vmatprep.subr.mxu0 0.0
        %651 = vmatpush2.msra.mxu0 0.0
        %652 = vmatprep.subr.mxu0 0.0
        %653 = vmatpush2.msra.mxu0 0.0
        %654 = vmatprep.mubr.f32.mxu0 0.0
        %655 = vmatmul.mubr.f32.gmra.mxu0 %v428
        %v656 = vpop.f32.mrf.mxu0
        %v657 = vadd.f32 %v568, %v656
        %v658 = vpop.f32.mrf.mxu0
        %v659 = vadd.f32 %v570, %v658
        %660 = vmatprep.mubr.f32.mxu0 0.0
        %661 = vmatmul.mubr.f32.gmra.mxu0 %v429
        %v662 = vpop.f32.mrf.mxu0
        %v663 = vadd.f32 %v574, %v662
        %v664 = vpop.f32.mrf.mxu0
        %v665 = vadd.f32 %v576, %v664
        %666 = vmatprep.mubr.f32.mxu0 0.0
        %667 = vmatmul.mubr.f32.gmra.mxu0 %v430
        %v668 = vpop.f32.mrf.mxu0
        %v669 = vadd.f32 %v580, %v668
        %v670 = vpop.f32.mrf.mxu0
        %v671 = vadd.f32 %v582, %v670
        %672 = vmatprep.mubr.f32.mxu0 0.0
        %673 = vmatmul.mubr.f32.gmra.mxu0 %v431
        %v674 = vpop.f32.mrf.mxu0
        %v675 = vadd.f32 %v586, %v674
        %v676 = vpop.f32.mrf.mxu0
        %v677 = vadd.f32 %v588, %v676
        %678 = vdwg.mxu0
        %v679 = vld [vmem:[#allocation2 + $0x2] sm:$0xff]
        %v680 = vld [vmem:[#allocation2 + $0xa] sm:$0xff]
        %v681 = vld [vmem:[#allocation2 + $0x1a] sm:$0xff]
        %v682 = vld [vmem:[#allocation2 + $0x22] sm:$0xff]
        %s683 = scalar_lea.vmem %s316, 512 [#allocation6]
        %v684 = vld [vmem:[%s683] sm:$0xff]
        %v685 = vld [vmem:[%s683 + $0x8] sm:$0xff]
        %v686 = vld [vmem:[%s683 + $0x10] sm:$0xff]
        %v687 = vld [vmem:[%s683 + $0x18] sm:$0xff]
        %v688 = vld [vmem:[%s683 + $0x20] sm:$0xff]
        %v689 = vld [vmem:[%s683 + $0x28] sm:$0xff]
        %v690 = vld [vmem:[%s683 + $0x30] sm:$0xff]
        %v691 = vld [vmem:[%s683 + $0x38] sm:$0xff]
        %v692 = vld [vmem:[%s683 + $0x40] sm:$0xff]
        %v693 = vld [vmem:[%s683 + $0x48] sm:$0xff]
        %v694 = vld [vmem:[%s683 + $0x50] sm:$0xff]
        %v695 = vld [vmem:[%s683 + $0x58] sm:$0xff]
        %v696 = vld [vmem:[%s683 + $0x60] sm:$0xff]
        %v697 = vld [vmem:[%s683 + $0x68] sm:$0xff]
        %v698 = vld [vmem:[%s683 + $0x70] sm:$0xff]
        %v699 = vld [vmem:[%s683 + $0x78] sm:$0xff]
        %v700 = vld [vmem:[%s683 + $0x80] sm:$0xff]
        %v701 = vld [vmem:[%s683 + $0x88] sm:$0xff]
        %v702 = vld [vmem:[%s683 + $0x90] sm:$0xff]
        %v703 = vld [vmem:[%s683 + $0x98] sm:$0xff]
        %v704 = vld [vmem:[%s683 + $0xa0] sm:$0xff]
        %v705 = vld [vmem:[%s683 + $0xa8] sm:$0xff]
        %v706 = vld [vmem:[%s683 + $0xb0] sm:$0xff]
        %v707 = vld [vmem:[%s683 + $0xb8] sm:$0xff]
        %v708 = vld [vmem:[%s683 + $0xc0] sm:$0xff]
        %v709 = vld [vmem:[%s683 + $0xc8] sm:$0xff]
        %v710 = vld [vmem:[%s683 + $0xd0] sm:$0xff]
        %v711 = vld [vmem:[%s683 + $0xd8] sm:$0xff]
        %v712 = vld [vmem:[%s683 + $0xe0] sm:$0xff]
        %v713 = vld [vmem:[%s683 + $0xe8] sm:$0xff]
        %v714 = vld [vmem:[%s683 + $0xf0] sm:$0xff]
        %v715 = vld [vmem:[%s683 + $0xf8] sm:$0xff]
        %716 = vmatprep.subr.mxu0 %v715
        %717 = vmatpush1.msra.mxu0 %v714
        %718 = vmatprep.subr.mxu0 %v713
        %719 = vmatpush1.msra.mxu0 %v712
        %720 = vmatprep.subr.mxu0 %v711
        %721 = vmatpush1.msra.mxu0 %v710
        %722 = vmatprep.subr.mxu0 %v709
        %723 = vmatpush1.msra.mxu0 %v708
        %724 = vmatprep.subr.mxu0 %v707
        %725 = vmatpush1.msra.mxu0 %v706
        %726 = vmatprep.subr.mxu0 %v705
        %727 = vmatpush1.msra.mxu0 %v704
        %728 = vmatprep.subr.mxu0 %v703
        %729 = vmatpush1.msra.mxu0 %v702
        %730 = vmatprep.subr.mxu0 %v701
        %731 = vmatpush1.msra.mxu0 %v700
        %732 = vmatprep.subr.mxu0 %v699
        %733 = vmatpush1.msra.mxu0 %v698
        %734 = vmatprep.subr.mxu0 %v697
        %735 = vmatpush1.msra.mxu0 %v696
        %736 = vmatprep.subr.mxu0 %v695
        %737 = vmatpush1.msra.mxu0 %v694
        %738 = vmatprep.subr.mxu0 %v693
        %739 = vmatpush1.msra.mxu0 %v692
        %740 = vmatprep.subr.mxu0 %v691
        %741 = vmatpush1.msra.mxu0 %v690
        %742 = vmatprep.subr.mxu0 %v689
        %743 = vmatpush1.msra.mxu0 %v688
        %744 = vmatprep.subr.mxu0 %v687
        %745 = vmatpush1.msra.mxu0 %v686
        %746 = vmatprep.subr.mxu0 %v685
        %747 = vmatpush1.msra.mxu0 %v684
        %748 = vmatprep.subr.mxu0 0.0
        %749 = vmatpush2.msra.mxu0 0.0
        %750 = vmatprep.subr.mxu0 0.0
        %751 = vmatpush2.msra.mxu0 0.0
        %752 = vmatprep.subr.mxu0 0.0
        %753 = vmatpush2.msra.mxu0 0.0
        %754 = vmatprep.subr.mxu0 0.0
        %755 = vmatpush2.msra.mxu0 0.0
        %756 = vmatprep.subr.mxu0 0.0
        %757 = vmatpush2.msra.mxu0 0.0
        %758 = vmatprep.subr.mxu0 0.0
        %759 = vmatpush2.msra.mxu0 0.0
        %760 = vmatprep.subr.mxu0 0.0
        %761 = vmatpush2.msra.mxu0 0.0
        %762 = vmatprep.subr.mxu0 0.0
        %763 = vmatpush2.msra.mxu0 0.0
        %764 = vmatprep.subr.mxu0 0.0
        %765 = vmatpush2.msra.mxu0 0.0
        %766 = vmatprep.subr.mxu0 0.0
        %767 = vmatpush2.msra.mxu0 0.0
        %768 = vmatprep.subr.mxu0 0.0
        %769 = vmatpush2.msra.mxu0 0.0
        %770 = vmatprep.subr.mxu0 0.0
        %771 = vmatpush2.msra.mxu0 0.0
        %772 = vmatprep.subr.mxu0 0.0
        %773 = vmatpush2.msra.mxu0 0.0
        %774 = vmatprep.subr.mxu0 0.0
        %775 = vmatpush2.msra.mxu0 0.0
        %776 = vmatprep.subr.mxu0 0.0
        %777 = vmatpush2.msra.mxu0 0.0
        %778 = vmatprep.subr.mxu0 0.0
        %779 = vmatpush2.msra.mxu0 0.0
        %780 = vmatprep.mubr.f32.mxu0 0.0
        %781 = vmatmul.mubr.f32.gmra.mxu0 %v679
        %v782 = vpop.f32.mrf.mxu0
        %v783 = vadd.f32 0.0, %v782
        %v784 = vpop.f32.mrf.mxu0
        %v785 = vadd.f32 0.0, %v784
        %786 = vmatprep.mubr.f32.mxu0 0.0
        %787 = vmatmul.mubr.f32.gmra.mxu0 %v680
        %v788 = vpop.f32.mrf.mxu0
        %v789 = vadd.f32 0.0, %v788
        %v790 = vpop.f32.mrf.mxu0
        %v791 = vadd.f32 0.0, %v790
        %792 = vmatprep.mubr.f32.mxu0 0.0
        %793 = vmatmul.mubr.f32.gmra.mxu0 %v681
        %v794 = vpop.f32.mrf.mxu0
        %v795 = vadd.f32 0.0, %v794
        %v796 = vpop.f32.mrf.mxu0
        %v797 = vadd.f32 0.0, %v796
        %798 = vmatprep.mubr.f32.mxu0 0.0
        %799 = vmatmul.mubr.f32.gmra.mxu0 %v682
        %v800 = vpop.f32.mrf.mxu0
        %v801 = vadd.f32 0.0, %v800
        %v802 = vpop.f32.mrf.mxu0
        %v803 = vadd.f32 0.0, %v802
        %804 = vdwg.mxu0
        %v805 = vadd.f32 %v657, %v783
        %v806 = vadd.f32 %v659, %v785
        %v807 = vadd.f32 %v663, %v789
        %v808 = vadd.f32 %v665, %v791
        %v809 = vadd.f32 %v669, %v795
        %v810 = vadd.f32 %v671, %v797
        %v811 = vadd.f32 %v675, %v801
        %v812 = vadd.f32 %v677, %v803
        %v813 = vld [vmem:[#allocation2 + $0x3] sm:$0xff]
        %v814 = vld [vmem:[#allocation2 + $0xb] sm:$0xff]
        %v815 = vld [vmem:[#allocation2 + $0x1b] sm:$0xff]
        %v816 = vld [vmem:[#allocation2 + $0x23] sm:$0xff]
        %s817 = scalar_lea.vmem %s316, 768 [#allocation6]
        %v818 = vld [vmem:[%s817] sm:$0xff]
        %v819 = vld [vmem:[%s817 + $0x8] sm:$0xff]
        %v820 = vld [vmem:[%s817 + $0x10] sm:$0xff]
        %v821 = vld [vmem:[%s817 + $0x18] sm:$0xff]
        %v822 = vld [vmem:[%s817 + $0x20] sm:$0xff]
        %v823 = vld [vmem:[%s817 + $0x28] sm:$0xff]
        %v824 = vld [vmem:[%s817 + $0x30] sm:$0xff]
        %v825 = vld [vmem:[%s817 + $0x38] sm:$0xff]
        %v826 = vld [vmem:[%s817 + $0x40] sm:$0xff]
        %v827 = vld [vmem:[%s817 + $0x48] sm:$0xff]
        %v828 = vld [vmem:[%s817 + $0x50] sm:$0xff]
        %v829 = vld [vmem:[%s817 + $0x58] sm:$0xff]
        %v830 = vld [vmem:[%s817 + $0x60] sm:$0xff]
        %v831 = vld [vmem:[%s817 + $0x68] sm:$0xff]
        %v832 = vld [vmem:[%s817 + $0x70] sm:$0xff]
        %v833 = vld [vmem:[%s817 + $0x78] sm:$0xff]
        %v834 = vld [vmem:[%s817 + $0x80] sm:$0xff]
        %v835 = vld [vmem:[%s817 + $0x88] sm:$0xff]
        %v836 = vld [vmem:[%s817 + $0x90] sm:$0xff]
        %v837 = vld [vmem:[%s817 + $0x98] sm:$0xff]
        %v838 = vld [vmem:[%s817 + $0xa0] sm:$0xff]
        %v839 = vld [vmem:[%s817 + $0xa8] sm:$0xff]
        %v840 = vld [vmem:[%s817 + $0xb0] sm:$0xff]
        %v841 = vld [vmem:[%s817 + $0xb8] sm:$0xff]
        %v842 = vld [vmem:[%s817 + $0xc0] sm:$0xff]
        %v843 = vld [vmem:[%s817 + $0xc8] sm:$0xff]
        %v844 = vld [vmem:[%s817 + $0xd0] sm:$0xff]
        %v845 = vld [vmem:[%s817 + $0xd8] sm:$0xff]
        %v846 = vld [vmem:[%s817 + $0xe0] sm:$0xff]
        %v847 = vld [vmem:[%s817 + $0xe8] sm:$0xff]
        %v848 = vld [vmem:[%s817 + $0xf0] sm:$0xff]
        %v849 = vld [vmem:[%s817 + $0xf8] sm:$0xff]
        %850 = vmatprep.subr.mxu0 %v849
        %851 = vmatpush1.msra.mxu0 %v848
        %852 = vmatprep.subr.mxu0 %v847
        %853 = vmatpush1.msra.mxu0 %v846
        %854 = vmatprep.subr.mxu0 %v845
        %855 = vmatpush1.msra.mxu0 %v844
        %856 = vmatprep.subr.mxu0 %v843
        %857 = vmatpush1.msra.mxu0 %v842
        %858 = vmatprep.subr.mxu0 %v841
        %859 = vmatpush1.msra.mxu0 %v840
        %860 = vmatprep.subr.mxu0 %v839
        %861 = vmatpush1.msra.mxu0 %v838
        %862 = vmatprep.subr.mxu0 %v837
        %863 = vmatpush1.msra.mxu0 %v836
        %864 = vmatprep.subr.mxu0 %v835
        %865 = vmatpush1.msra.mxu0 %v834
        %866 = vmatprep.subr.mxu0 %v833
        %867 = vmatpush1.msra.mxu0 %v832
        %868 = vmatprep.subr.mxu0 %v831
        %869 = vmatpush1.msra.mxu0 %v830
        %870 = vmatprep.subr.mxu0 %v829
        %871 = vmatpush1.msra.mxu0 %v828
        %872 = vmatprep.subr.mxu0 %v827
        %873 = vmatpush1.msra.mxu0 %v826
        %874 = vmatprep.subr.mxu0 %v825
        %875 = vmatpush1.msra.mxu0 %v824
        %876 = vmatprep.subr.mxu0 %v823
        %877 = vmatpush1.msra.mxu0 %v822
        %878 = vmatprep.subr.mxu0 %v821
        %879 = vmatpush1.msra.mxu0 %v820
        %880 = vmatprep.subr.mxu0 %v819
        %881 = vmatpush1.msra.mxu0 %v818
        %882 = vmatprep.subr.mxu0 0.0
        %883 = vmatpush2.msra.mxu0 0.0
        %884 = vmatprep.subr.mxu0 0.0
        %885 = vmatpush2.msra.mxu0 0.0
        %886 = vmatprep.subr.mxu0 0.0
        %887 = vmatpush2.msra.mxu0 0.0
        %888 = vmatprep.subr.mxu0 0.0
        %889 = vmatpush2.msra.mxu0 0.0
        %890 = vmatprep.subr.mxu0 0.0
        %891 = vmatpush2.msra.mxu0 0.0
        %892 = vmatprep.subr.mxu0 0.0
        %893 = vmatpush2.msra.mxu0 0.0
        %894 = vmatprep.subr.mxu0 0.0
        %895 = vmatpush2.msra.mxu0 0.0
        %896 = vmatprep.subr.mxu0 0.0
        %897 = vmatpush2.msra.mxu0 0.0
        %898 = vmatprep.subr.mxu0 0.0
        %899 = vmatpush2.msra.mxu0 0.0
        %900 = vmatprep.subr.mxu0 0.0
        %901 = vmatpush2.msra.mxu0 0.0
        %902 = vmatprep.subr.mxu0 0.0
        %903 = vmatpush2.msra.mxu0 0.0
        %904 = vmatprep.subr.mxu0 0.0
        %905 = vmatpush2.msra.mxu0 0.0
        %906 = vmatprep.subr.mxu0 0.0
        %907 = vmatpush2.msra.mxu0 0.0
        %908 = vmatprep.subr.mxu0 0.0
        %909 = vmatpush2.msra.mxu0 0.0
        %910 = vmatprep.subr.mxu0 0.0
        %911 = vmatpush2.msra.mxu0 0.0
        %912 = vmatprep.subr.mxu0 0.0
        %913 = vmatpush2.msra.mxu0 0.0
        %914 = vmatprep.mubr.f32.mxu0 0.0
        %915 = vmatmul.mubr.f32.gmra.mxu0 %v813
        %v916 = vpop.f32.mrf.mxu0
        %v917 = vadd.f32 0.0, %v916
        %v918 = vpop.f32.mrf.mxu0
        %v919 = vadd.f32 0.0, %v918
        %920 = vmatprep.mubr.f32.mxu0 0.0
        %921 = vmatmul.mubr.f32.gmra.mxu0 %v814
        %v922 = vpop.f32.mrf.mxu0
        %v923 = vadd.f32 0.0, %v922
        %v924 = vpop.f32.mrf.mxu0
        %v925 = vadd.f32 0.0, %v924
        %926 = vmatprep.mubr.f32.mxu0 0.0
        %927 = vmatmul.mubr.f32.gmra.mxu0 %v815
        %v928 = vpop.f32.mrf.mxu0
        %v929 = vadd.f32 0.0, %v928
        %v930 = vpop.f32.mrf.mxu0
        %v931 = vadd.f32 0.0, %v930
        %932 = vmatprep.mubr.f32.mxu0 0.0
        %933 = vmatmul.mubr.f32.gmra.mxu0 %v816
        %v934 = vpop.f32.mrf.mxu0
        %v935 = vadd.f32 0.0, %v934
        %v936 = vpop.f32.mrf.mxu0
        %v937 = vadd.f32 0.0, %v936
        %938 = vdwg.mxu0
        %v939 = vadd.f32 %v805, %v917
        %v940 = vadd.f32 %v806, %v919
        %v941 = vadd.f32 %v807, %v923
        %v942 = vadd.f32 %v808, %v925
        %v943 = vadd.f32 %v809, %v929
        %v944 = vadd.f32 %v810, %v931
        %v945 = vadd.f32 %v811, %v935
        %v946 = vadd.f32 %v812, %v937
        %v947 = vld [vmem:[#allocation2 + $0x4] sm:$0xff]
        %v948 = vld [vmem:[#allocation2 + $0xc] sm:$0xff]
        %v949 = vld [vmem:[#allocation2 + $0x1c] sm:$0xff]
        %v950 = vld [vmem:[#allocation2 + $0x24] sm:$0xff]
        %s951 = scalar_lea.vmem %s316, 1024 [#allocation6]
        %v952 = vld [vmem:[%s951] sm:$0xff]
        %v953 = vld [vmem:[%s951 + $0x8] sm:$0xff]
        %v954 = vld [vmem:[%s951 + $0x10] sm:$0xff]
        %v955 = vld [vmem:[%s951 + $0x18] sm:$0xff]
        %v956 = vld [vmem:[%s951 + $0x20] sm:$0xff]
        %v957 = vld [vmem:[%s951 + $0x28] sm:$0xff]
        %v958 = vld [vmem:[%s951 + $0x30] sm:$0xff]
        %v959 = vld [vmem:[%s951 + $0x38] sm:$0xff]
        %v960 = vld [vmem:[%s951 + $0x40] sm:$0xff]
        %v961 = vld [vmem:[%s951 + $0x48] sm:$0xff]
        %v962 = vld [vmem:[%s951 + $0x50] sm:$0xff]
        %v963 = vld [vmem:[%s951 + $0x58] sm:$0xff]
        %v964 = vld [vmem:[%s951 + $0x60] sm:$0xff]
        %v965 = vld [vmem:[%s951 + $0x68] sm:$0xff]
        %v966 = vld [vmem:[%s951 + $0x70] sm:$0xff]
        %v967 = vld [vmem:[%s951 + $0x78] sm:$0xff]
        %v968 = vld [vmem:[%s951 + $0x80] sm:$0xff]
        %v969 = vld [vmem:[%s951 + $0x88] sm:$0xff]
        %v970 = vld [vmem:[%s951 + $0x90] sm:$0xff]
        %v971 = vld [vmem:[%s951 + $0x98] sm:$0xff]
        %v972 = vld [vmem:[%s951 + $0xa0] sm:$0xff]
        %v973 = vld [vmem:[%s951 + $0xa8] sm:$0xff]
        %v974 = vld [vmem:[%s951 + $0xb0] sm:$0xff]
        %v975 = vld [vmem:[%s951 + $0xb8] sm:$0xff]
        %v976 = vld [vmem:[%s951 + $0xc0] sm:$0xff]
        %v977 = vld [vmem:[%s951 + $0xc8] sm:$0xff]
        %v978 = vld [vmem:[%s951 + $0xd0] sm:$0xff]
        %v979 = vld [vmem:[%s951 + $0xd8] sm:$0xff]
        %v980 = vld [vmem:[%s951 + $0xe0] sm:$0xff]
        %v981 = vld [vmem:[%s951 + $0xe8] sm:$0xff]
        %v982 = vld [vmem:[%s951 + $0xf0] sm:$0xff]
        %v983 = vld [vmem:[%s951 + $0xf8] sm:$0xff]
        %984 = vmatprep.subr.mxu0 %v983
        %985 = vmatpush1.msra.mxu0 %v982
        %986 = vmatprep.subr.mxu0 %v981
        %987 = vmatpush1.msra.mxu0 %v980
        %988 = vmatprep.subr.mxu0 %v979
        %989 = vmatpush1.msra.mxu0 %v978
        %990 = vmatprep.subr.mxu0 %v977
        %991 = vmatpush1.msra.mxu0 %v976
        %992 = vmatprep.subr.mxu0 %v975
        %993 = vmatpush1.msra.mxu0 %v974
        %994 = vmatprep.subr.mxu0 %v973
        %995 = vmatpush1.msra.mxu0 %v972
        %996 = vmatprep.subr.mxu0 %v971
        %997 = vmatpush1.msra.mxu0 %v970
        %998 = vmatprep.subr.mxu0 %v969
        %999 = vmatpush1.msra.mxu0 %v968
        %1000 = vmatprep.subr.mxu0 %v967
        %1001 = vmatpush1.msra.mxu0 %v966
        %1002 = vmatprep.subr.mxu0 %v965
        %1003 = vmatpush1.msra.mxu0 %v964
        %1004 = vmatprep.subr.mxu0 %v963
        %1005 = vmatpush1.msra.mxu0 %v962
        %1006 = vmatprep.subr.mxu0 %v961
        %1007 = vmatpush1.msra.mxu0 %v960
        %1008 = vmatprep.subr.mxu0 %v959
        %1009 = vmatpush1.msra.mxu0 %v958
        %1010 = vmatprep.subr.mxu0 %v957
        %1011 = vmatpush1.msra.mxu0 %v956
        %1012 = vmatprep.subr.mxu0 %v955
        %1013 = vmatpush1.msra.mxu0 %v954
        %1014 = vmatprep.subr.mxu0 %v953
        %1015 = vmatpush1.msra.mxu0 %v952
        %1016 = vmatprep.subr.mxu0 0.0
        %1017 = vmatpush2.msra.mxu0 0.0
        %1018 = vmatprep.subr.mxu0 0.0
        %1019 = vmatpush2.msra.mxu0 0.0
        %1020 = vmatprep.subr.mxu0 0.0
        %1021 = vmatpush2.msra.mxu0 0.0
        %1022 = vmatprep.subr.mxu0 0.0
        %1023 = vmatpush2.msra.mxu0 0.0
        %1024 = vmatprep.subr.mxu0 0.0
        %1025 = vmatpush2.msra.mxu0 0.0
        %1026 = vmatprep.subr.mxu0 0.0
        %1027 = vmatpush2.msra.mxu0 0.0
        %1028 = vmatprep.subr.mxu0 0.0
        %1029 = vmatpush2.msra.mxu0 0.0
        %1030 = vmatprep.subr.mxu0 0.0
        %1031 = vmatpush2.msra.mxu0 0.0
        %1032 = vmatprep.subr.mxu0 0.0
        %1033 = vmatpush2.msra.mxu0 0.0
        %1034 = vmatprep.subr.mxu0 0.0
        %1035 = vmatpush2.msra.mxu0 0.0
        %1036 = vmatprep.subr.mxu0 0.0
        %1037 = vmatpush2.msra.mxu0 0.0
        %1038 = vmatprep.subr.mxu0 0.0
        %1039 = vmatpush2.msra.mxu0 0.0
        %1040 = vmatprep.subr.mxu0 0.0
        %1041 = vmatpush2.msra.mxu0 0.0
        %1042 = vmatprep.subr.mxu0 0.0
        %1043 = vmatpush2.msra.mxu0 0.0
        %1044 = vmatprep.subr.mxu0 0.0
        %1045 = vmatpush2.msra.mxu0 0.0
        %1046 = vmatprep.subr.mxu0 0.0
        %1047 = vmatpush2.msra.mxu0 0.0
        %1048 = vmatprep.mubr.f32.mxu0 0.0
        %1049 = vmatmul.mubr.f32.gmra.mxu0 %v947
        %v1050 = vpop.f32.mrf.mxu0
        %v1051 = vadd.f32 0.0, %v1050
        %v1052 = vpop.f32.mrf.mxu0
        %v1053 = vadd.f32 0.0, %v1052
        %1054 = vmatprep.mubr.f32.mxu0 0.0
        %1055 = vmatmul.mubr.f32.gmra.mxu0 %v948
        %v1056 = vpop.f32.mrf.mxu0
        %v1057 = vadd.f32 0.0, %v1056
        %v1058 = vpop.f32.mrf.mxu0
        %v1059 = vadd.f32 0.0, %v1058
        %1060 = vmatprep.mubr.f32.mxu0 0.0
        %1061 = vmatmul.mubr.f32.gmra.mxu0 %v949
        %v1062 = vpop.f32.mrf.mxu0
        %v1063 = vadd.f32 0.0, %v1062
        %v1064 = vpop.f32.mrf.mxu0
        %v1065 = vadd.f32 0.0, %v1064
        %1066 = vmatprep.mubr.f32.mxu0 0.0
        %1067 = vmatmul.mubr.f32.gmra.mxu0 %v950
        %v1068 = vpop.f32.mrf.mxu0
        %v1069 = vadd.f32 0.0, %v1068
        %v1070 = vpop.f32.mrf.mxu0
        %v1071 = vadd.f32 0.0, %v1070
        %1072 = vdwg.mxu0
        %v1073 = vadd.f32 %v939, %v1051
        %v1074 = vadd.f32 %v940, %v1053
        %v1075 = vadd.f32 %v941, %v1057
        %v1076 = vadd.f32 %v942, %v1059
        %v1077 = vadd.f32 %v943, %v1063
        %v1078 = vadd.f32 %v944, %v1065
        %v1079 = vadd.f32 %v945, %v1069
        %v1080 = vadd.f32 %v946, %v1071
        %v1081 = vld [vmem:[%s325] sm:$0x3]
        %v1083 = vlaneseq
        %v1084 = vshrl.u32 %v1083, 7
        %v1085 = vsub.s32 0, %v1084
        %v1086 = vrot.slane %v1081, %v1085
        %v1087 = vlaneseq
        %v1088 = vshrl.u32 %v1087, 7
        %v1089 = vsub.s32 1, %v1088
        %v1090 = vrot.slane %v1081, %v1089
        %v1093 = vadd.f32 %v1073, %v1086
        %v1094 = vadd.f32 %v1074, %v1090
        %v1095 = vadd.f32 %v1075, %v1086
        %v1096 = vadd.f32 %v1076, %v1090
        %v1097 = vadd.f32 %v1077, %v1086
        %v1098 = vadd.f32 %v1078, %v1090
        %v1099 = vadd.f32 %v1079, %v1086
        %v1100 = vadd.f32 %v1080, %v1090
        %v1101 = vxor.u32 %v1094, 2147483648
        %v1102 = vxor.u32 %v1096, 2147483648
        %v1103 = vxor.u32 %v1098, 2147483648
        %v1104 = vxor.u32 %v1100, 2147483648
        %v1105 = vmul.f32 %v1101, 1.442695
        %v1106 = vpow.pop %v1105
        %v1107 = vmul.f32 %v1102, 1.442695
        %v1108 = vpow.pop %v1107
        %v1109 = vmul.f32 %v1103, 1.442695
        %v1110 = vpow.pop %v1109
        %v1111 = vmul.f32 %v1104, 1.442695
        %v1112 = vpow.pop %v1111
        %v1113 = vadd.f32 %v1106, 1.0
        %v1114 = vadd.f32 %v1108, 1.0
        %v1115 = vadd.f32 %v1110, 1.0
        %v1116 = vadd.f32 %v1112, 1.0
        %v1117 = vrcp.pop %v1113
        %v1118 = vmul.f32 1.0, %v1117
        %v1119 = vrcp.pop %v1114
        %v1120 = vmul.f32 1.0, %v1119
        %v1121 = vrcp.pop %v1115
        %v1122 = vmul.f32 1.0, %v1121
        %v1123 = vrcp.pop %v1116
        %v1124 = vmul.f32 1.0, %v1123
        %v1125 = vmul.f32 %v1093, %v1118
        %v1126 = vmul.f32 %v1095, %v1120
        %v1127 = vmul.f32 %v1097, %v1122
        %v1128 = vmul.f32 %v1099, %v1124
        %v1129 = vld [vmem:[%s343] sm:$0x7]
        %v1130 = vld [vmem:[%s334] sm:$0xff]
        %v1131 = vld [vmem:[%s334 + $0x8] sm:$0xff]
        %v1132 = vld [vmem:[%s334 + $0x10] sm:$0xff]
        %v1133 = vld [vmem:[%s334 + $0x18] sm:$0xff]
        %v1134 = vld [vmem:[%s334 + $0x20] sm:$0xff]
        %v1135 = vld [vmem:[%s334 + $0x28] sm:$0xff]
        %v1136 = vld [vmem:[%s334 + $0x30] sm:$0xff]
        %v1137 = vld [vmem:[%s334 + $0x38] sm:$0xff]
        %v1138 = vld [vmem:[%s334 + $0x40] sm:$0xff]
        %v1139 = vld [vmem:[%s334 + $0x48] sm:$0xff]
        %v1140 = vld [vmem:[%s334 + $0x50] sm:$0xff]
        %v1141 = vld [vmem:[%s334 + $0x58] sm:$0xff]
        %v1142 = vld [vmem:[%s334 + $0x60] sm:$0xff]
        %v1143 = vld [vmem:[%s334 + $0x68] sm:$0xff]
        %v1144 = vld [vmem:[%s334 + $0x70] sm:$0xff]
        %v1145 = vld [vmem:[%s334 + $0x78] sm:$0xff]
        %v1146 = vlaneseq
        %v1147 = vshrl.u32 %v1146, 7
        %v1148 = vsub.s32 0, %v1147
        %v1149 = vrot.slane %v1129, %v1148
        %1150 = vmatprep.subr.mxu0 0.0
        %1151 = vmatpush1.msra.mxu0 %v1145
        %1152 = vmatprep.subr.mxu0 0.0
        %1153 = vmatpush1.msra.mxu0 %v1144
        %1154 = vmatprep.subr.mxu0 0.0
        %1155 = vmatpush1.msra.mxu0 %v1143
        %1156 = vmatprep.subr.mxu0 0.0
        %1157 = vmatpush1.msra.mxu0 %v1142
        %1158 = vmatprep.subr.mxu0 0.0
        %1159 = vmatpush1.msra.mxu0 %v1141
        %1160 = vmatprep.subr.mxu0 0.0
        %1161 = vmatpush1.msra.mxu0 %v1140
        %1162 = vmatprep.subr.mxu0 0.0
        %1163 = vmatpush1.msra.mxu0 %v1139
        %1164 = vmatprep.subr.mxu0 0.0
        %1165 = vmatpush1.msra.mxu0 %v1138
        %1166 = vmatprep.subr.mxu0 0.0
        %1167 = vmatpush1.msra.mxu0 %v1137
        %1168 = vmatprep.subr.mxu0 0.0
        %1169 = vmatpush1.msra.mxu0 %v1136
        %1170 = vmatprep.subr.mxu0 0.0
        %1171 = vmatpush1.msra.mxu0 %v1135
        %1172 = vmatprep.subr.mxu0 0.0
        %1173 = vmatpush1.msra.mxu0 %v1134
        %1174 = vmatprep.subr.mxu0 0.0
        %1175 = vmatpush1.msra.mxu0 %v1133
        %1176 = vmatprep.subr.mxu0 0.0
        %1177 = vmatpush1.msra.mxu0 %v1132
        %1178 = vmatprep.subr.mxu0 0.0
        %1179 = vmatpush1.msra.mxu0 %v1131
        %1180 = vmatprep.subr.mxu0 0.0
        %1181 = vmatpush1.msra.mxu0 %v1130
        %1182 = vmatprep.subr.mxu0 0.0
        %1183 = vmatpush2.msra.mxu0 0.0
        %1184 = vmatprep.subr.mxu0 0.0
        %1185 = vmatpush2.msra.mxu0 0.0
        %1186 = vmatprep.subr.mxu0 0.0
        %1187 = vmatpush2.msra.mxu0 0.0
        %1188 = vmatprep.subr.mxu0 0.0
        %1189 = vmatpush2.msra.mxu0 0.0
        %1190 = vmatprep.subr.mxu0 0.0
        %1191 = vmatpush2.msra.mxu0 0.0
        %1192 = vmatprep.subr.mxu0 0.0
        %1193 = vmatpush2.msra.mxu0 0.0
        %1194 = vmatprep.subr.mxu0 0.0
        %1195 = vmatpush2.msra.mxu0 0.0
        %1196 = vmatprep.subr.mxu0 0.0
        %1197 = vmatpush2.msra.mxu0 0.0
        %1198 = vmatprep.subr.mxu0 0.0
        %1199 = vmatpush2.msra.mxu0 0.0
        %1200 = vmatprep.subr.mxu0 0.0
        %1201 = vmatpush2.msra.mxu0 0.0
        %1202 = vmatprep.subr.mxu0 0.0
        %1203 = vmatpush2.msra.mxu0 0.0
        %1204 = vmatprep.subr.mxu0 0.0
        %1205 = vmatpush2.msra.mxu0 0.0
        %1206 = vmatprep.subr.mxu0 0.0
        %1207 = vmatpush2.msra.mxu0 0.0
        %1208 = vmatprep.subr.mxu0 0.0
        %1209 = vmatpush2.msra.mxu0 0.0
        %1210 = vmatprep.subr.mxu0 0.0
        %1211 = vmatpush2.msra.mxu0 0.0
        %1212 = vmatprep.subr.mxu0 0.0
        %1213 = vmatpush2.msra.mxu0 0.0
        %1214 = vmatprep.mubr.f32.mxu0 0.0
        %1215 = vmatmul.mubr.f32.gmra.mxu0 %v1125
        %v1216 = vpop.f32.mrf.mxu0
        %v1217 = vadd.f32 %v1149, %v1216
        %v1218 = vpop.f32.mrf.mxu0
        %1219 = vmatprep.mubr.f32.mxu0 0.0
        %1220 = vmatmul.mubr.f32.gmra.mxu0 %v1126
        %v1221 = vpop.f32.mrf.mxu0
        %v1222 = vadd.f32 %v1149, %v1221
        %v1223 = vpop.f32.mrf.mxu0
        %1224 = vmatprep.mubr.f32.mxu0 0.0
        %1225 = vmatmul.mubr.f32.gmra.mxu0 %v1127
        %v1226 = vpop.f32.mrf.mxu0
        %v1227 = vadd.f32 %v1149, %v1226
        %v1228 = vpop.f32.mrf.mxu0
        %1229 = vmatprep.mubr.f32.mxu0 0.0
        %1230 = vmatmul.mubr.f32.gmra.mxu0 %v1128
        %v1231 = vpop.f32.mrf.mxu0
        %v1232 = vadd.f32 %v1149, %v1231
        %v1233 = vpop.f32.mrf.mxu0
        %1234 = vdwg.mxu0
        %v1235 = vadd.f32 %v679, %v1217
        %v1236 = vadd.f32 %v680, %v1222
        %v1237 = vadd.f32 %v681, %v1227
        %v1238 = vadd.f32 %v682, %v1232
        %1239 = vadd.xlane.f32.xlu0 %v1235
        %v1240 = vpop.xlane.xlu0 %1239
        %1241 = vadd.xlane.f32.xlu0 %v1236
        %v1242 = vpop.xlane.xlu0 %1241
        %1243 = vadd.xlane.f32.xlu0 %v1237
        %v1244 = vpop.xlane.xlu0 %1243
        %1245 = vadd.xlane.f32.xlu0 %v1238
        %v1246 = vpop.xlane.xlu0 %1245
        %v1247 = vmul.f32 %v1240, 0.125
        %v1248 = vmul.f32 %v1242, 0.125
        %v1249 = vmul.f32 %v1244, 0.125
        %v1250 = vmul.f32 %v1246, 0.125
        %v1251 = vlaneseq
        %v1252 = vand.u32 %v1251, 127
        %vm1253 = vcmp.lt.s32.totalorder %v1252, 8
        %v1254 = vsel %vm1253, 1, 0
        %v1255 = vcvt.s32.f32 %v1254
        %v1256 = vsub.f32 %v1235, %v1247
        %v1257 = vsub.f32 %v1236, %v1248
        %v1258 = vsub.f32 %v1237, %v1249
        %v1259 = vsub.f32 %v1238, %v1250
        %v1260 = vmul.f32 %v1256, %v1255
        %v1261 = vmul.f32 %v1257, %v1255
        %v1262 = vmul.f32 %v1258, %v1255
        %v1263 = vmul.f32 %v1259, %v1255
        %v1264 = vmul.f32 %v1260, %v1260
        %v1265 = vmul.f32 %v1261, %v1261
        %v1266 = vmul.f32 %v1262, %v1262
        %v1267 = vmul.f32 %v1263, %v1263
        %1268 = vadd.xlane.f32.xlu0 %v1264
        %v1269 = vpop.xlane.xlu0 %1268
        %1270 = vadd.xlane.f32.xlu0 %v1265
        %v1271 = vpop.xlane.xlu0 %1270
        %1272 = vadd.xlane.f32.xlu0 %v1266
        %v1273 = vpop.xlane.xlu0 %1272
        %1274 = vadd.xlane.f32.xlu0 %v1267
        %v1275 = vpop.xlane.xlu0 %1274
        %v1276 = vmul.f32 %v1269, 0.125
        %v1277 = vmul.f32 %v1271, 0.125
        %v1278 = vmul.f32 %v1273, 0.125
        %v1279 = vmul.f32 %v1275, 0.125
        %v1280 = vadd.f32 %v1276, 1e-05
        %v1281 = vadd.f32 %v1277, 1e-05
        %v1282 = vadd.f32 %v1278, 1e-05
        %v1283 = vadd.f32 %v1279, 1e-05
        %v1284 = vrsqrt.pop %v1280
        %v1285 = vrsqrt.pop %v1281
        %v1286 = vrsqrt.pop %v1282
        %v1287 = vrsqrt.pop %v1283
        %v1288 = vmul.f32 %v1260, %v1284
        %v1289 = vmul.f32 %v1261, %v1285
        %v1290 = vmul.f32 %v1262, %v1286
        %v1291 = vmul.f32 %v1263, %v1287
        %v1292 = vlaneseq
        %v1293 = vshrl.u32 %v1292, 7
        %v1294 = vsub.s32 1, %v1293
        %v1295 = vrot.slane %v1129, %v1294
        %v1296 = vmul.f32 %v1288, %v1295
        %v1297 = vmul.f32 %v1289, %v1295
        %v1298 = vmul.f32 %v1290, %v1295
        %v1299 = vmul.f32 %v1291, %v1295
        %v1300 = vlaneseq
        %v1301 = vshrl.u32 %v1300, 7
        %v1302 = vsub.s32 2, %v1301
        %v1303 = vrot.slane %v1129, %v1302
        %v1304 = vadd.f32 %v1296, %v1303
        %v1305 = vadd.f32 %v1297, %v1303
        %v1306 = vadd.f32 %v1298, %v1303
        %v1307 = vadd.f32 %v1299, %v1303
        %v1308 = vld [vmem:[%s0] sm:$0xff]
        %v1309 = vld [vmem:[%s0 + $0x8] sm:$0xff]
        %v1310 = vld [vmem:[%s0 + $0x10] sm:$0xff]
        %v1311 = vld [vmem:[%s0 + $0x18] sm:$0xff]
        %1313 = vset.pattern.permute.xlu0 0
        %1314 = vperm.xlu0 %1313, %v1308
        %v1315 = vpop.permute.xlu0 %1314
        %1318 = vset.pattern.permute.xlu0 0
        %1319 = vperm.xlu0 %1318, %v1309
        %v1320 = vpop.permute.xlu0 %1319
        %1323 = vset.pattern.permute.xlu0 0
        %1324 = vperm.xlu0 %1323, %v1310
        %v1325 = vpop.permute.xlu0 %1324
        %1328 = vset.pattern.permute.xlu0 0
        %1329 = vperm.xlu0 %1328, %v1311
        %v1330 = vpop.permute.xlu0 %1329
        %v1332 = vmul.f32 %v1304, %v1315
        %v1333 = vmul.f32 %v1305, %v1320
        %v1334 = vmul.f32 %v1306, %v1325
        %v1335 = vmul.f32 %v1307, %v1330
        %1336 = vst [vmem:[#allocation2 + $0x2] sm:$0xff] %v1332
        %1337 = vst [vmem:[#allocation2 + $0xa] sm:$0xff] %v1333
        %1338 = vst [vmem:[#allocation2 + $0x1a] sm:$0xff] %v1334
        %1339 = vst [vmem:[#allocation2 + $0x22] sm:$0xff] %v1335
        %p1340 = scmp.eq.s32.totalorder %s25, 2
        // Predicated region
        $region69: #{tpu_custom_call.1} parent=43 // pred_check
          %p1341 = pneg %p1340
        $region70: #{tpu_custom_call.1} parent=43 // pred_check_branch
          %1343 = sbr.rel (%p1341) target = $region72
        $region71: #{tpu_custom_call.1} parent=43 // pred_region
          %1344 = vst [vmem:[#allocation12] sm:$0xff] %v1332
          %1345 = vst [vmem:[#allocation12 + $0x8] sm:$0xff] %v1333
          %1346 = vst [vmem:[#allocation12 + $0x10] sm:$0xff] %v1334
          %1347 = vst [vmem:[#allocation12 + $0x18] sm:$0xff] %v1335
        $region72: #{tpu_custom_call.1} parent=43 // pred_fallthru
          _
        // Predicated region
        $region73: #{tpu_custom_call.1} parent=43 // pred_check
          %p1348 = pneg %p184
        $region74: #{tpu_custom_call.1} parent=43 // pred_check_branch
          %1350 = sbr.rel (%p1348) target = $region76
        $region75: #{tpu_custom_call.1} parent=43 // pred_region
          %s1352 = ssub.s32 512, 512
          %1353 = vsyncadd [#allocation5], %s1352
          %s1354 = sshll.u32 [#allocation12], 4
          %s1355 = int_to_ptr.vmem [resolvable:$true] %s1354
          %1360 = dma.vmem_to_hbm [thread:$0]  %s1355, 512, %s6, [#allocation5], 128, 128, 8
        $region76: #{tpu_custom_call.1} parent=43 // pred_fallthru
          _
        // Predicated region
        $region77: #{tpu_custom_call.1} parent=43 // pred_check
          %p1361 = pneg %p184
        $region78: #{tpu_custom_call.1} parent=43 // pred_check_branch
          %1363 = sbr.rel (%p1361) target = $region80
        $region79: #{tpu_custom_call.1} parent=43 // pred_region
          %1364 = dma.done [#allocation5], 512
        $region80: #{tpu_custom_call.1} parent=43 // pred_fallthru
          _
      $region44: #{tpu_custom_call.1} parent=5 // pred_fallthru
        _
      %p1365 = scmp.le.s32.totalorder 2, %s20
      // Predicated region
      $region81: #{tpu_custom_call.1} parent=5 // pred_check
        %p1366 = pneg %p1365
      $region82: #{tpu_custom_call.1} parent=5 // pred_check_branch
        %1368 = sbr.rel (%p1366) target = $region84
      $region83: #{tpu_custom_call.1} parent=5 // pred_region
        %s1369 = ssub.s32 %s20, 2
      $region84: #{tpu_custom_call.1} parent=5 // pred_fallthru
        _
    $region6: #{tpu_custom_call.1} parent=1 // loop_footer
      %s24 = sadd.s32 1, %s20
    $region7: #{tpu_custom_call.1} parent=1 // loop_footer_branch
      %19 = sbr.rel target = $region3
    $region8: #{tpu_custom_call.1} parent=1 // loop_exit
      _
    %1370 = vsyncpa [#allocation4], 1
    %s1371 = scalar_lea.sflag [#allocation4], 1
    %1372 = vsyncpa %s1371, 1
    %1373 = vsyncpa [#allocation7], 1
    %s1374 = scalar_lea.sflag [#allocation7], 1
    %1375 = vsyncpa %s1374, 1
    %1376 = vsyncpa [#allocation10], 1
    %s1377 = scalar_lea.sflag [#allocation10], 1
    %1378 = vsyncpa %s1377, 1
    %1379 = vsyncpa [#allocation5], 1
    %s1380 = scalar_lea.sflag [#allocation5], 1
    %1381 = vsyncpa %s1380, 1

</llo_original>
